<compile_context>
chip_gen: v5e
topology: v5e:2x2
jax: 0.10.0
libtpu: 0.0.40
codegen_flags: <defaults>
</compile_context>

<pallas_src>
import functools

import jax
import jax.numpy as jnp
from jax.experimental import pallas as pl
from jax.experimental.pallas import tpu as pltpu

OUT_PAD = 128  # packed head-output width fed to the final matmul / transpose


def _round8(x):
    return ((x + 7) // 8) * 8


# ----------------------------------------------------------------------------
# Parameter construction mirroring hgpflow's build_layers():
#   Linear(in, f0) + ReLU, then for each subsequent hidden layer:
#   [BatchNorm1d(prev)] + Linear(prev, f_i) + ReLU, then Linear(f[-1], out),
#   optional final activation (Sigmoid for beta_net).
# ----------------------------------------------------------------------------
def build_mlp_specs_and_params(key, in_size, out_size, features, add_batch_norm=False):
    specs = []   # list of ("linear", relu_bool) or ("bn",)
    params = []  # flat list of jnp arrays, consumed in order

    def lin(kk, din, dout):
        k1, k2 = jax.random.split(kk)
        w = jax.random.normal(k1, (din, dout), jnp.float32) * (1.0 / jnp.sqrt(float(din)))
        b = jax.random.normal(k2, (1, dout), jnp.float32) * 0.01
        return w, b

    key, sub = jax.random.split(key)
    w, b = lin(sub, in_size, features[0])
    specs.append(("linear", True))
    params += [w, b]

    for i in range(1, len(features)):
        if add_batch_norm:
            feat = features[i - 1]
            params += [
                jnp.ones((1, feat), jnp.float32),   # gamma
                jnp.zeros((1, feat), jnp.float32),  # beta
                jnp.zeros((1, feat), jnp.float32),  # running mean
                jnp.ones((1, feat), jnp.float32),   # running var
            ]
            specs.append(("bn",))
        key, sub = jax.random.split(key)
        w, b = lin(sub, features[i - 1], features[i])
        specs.append(("linear", True))
        params += [w, b]

    key, sub = jax.random.split(key)
    w, b = lin(sub, features[-1], out_size)
    specs.append(("linear", False))
    params += [w, b]
    return specs, params


# Pure-JAX reference (raw params, explicit eval-mode BN) for correctness checks.
def mlp_reference(x, specs, params, final_sigmoid=False):
    h = x.astype(jnp.float32)
    idx = 0
    for spec in specs:
        if spec[0] == "bn":
            gamma, beta, mean, var = params[idx], params[idx + 1], params[idx + 2], params[idx + 3]
            idx += 4
            h = (h - mean) * jax.lax.rsqrt(var + 1e-5) * gamma + beta
        else:
            w, b = params[idx], params[idx + 1]
            idx += 2
            h = h @ w + b
            if spec[1]:
                h = jnp.maximum(h, 0.0)
    if final_sigmoid:
        h = jax.nn.sigmoid(h)
    return h


# ----------------------------------------------------------------------------
# Folding / stacking the six heads into per-layer wide matrices.
# ----------------------------------------------------------------------------
def _fold_bn(specs, params):
    """Fold eval-mode BatchNorm into the following Linear. Returns [(W, b), ...]."""
    layers = []
    idx = 0
    pending = None
    for spec in specs:
        if spec[0] == "bn":
            gamma, beta_bn, mean, var = params[idx:idx + 4]
            idx += 4
            s = gamma * jax.lax.rsqrt(var + 1e-5)   # [1, feat]
            t = beta_bn - mean * s                  # [1, feat]
            pending = (s, t)
        else:
            w, b = params[idx], params[idx + 1]
            idx += 2
            if pending is not None:
                s, t = pending
                b = b + t @ w                       # fold shift through W
                w = w * s.reshape(-1, 1)            # scale rows of W
                pending = None
            layers.append((w, b))
    return layers


def _stack_heads(per_head_layers, out_pad):
    """Stack per-head (W, b) layer lists into wide / block-diagonal layers.

    Heads with fewer hidden layers are padded with identity hidden layers
    (exact, since post-ReLU activations are non-negative).
    """
    max_hidden = max(len(layers) - 1 for layers in per_head_layers)
    aligned = []
    for layers in per_head_layers:
        hidden = list(layers[:-1])
        final = layers[-1]
        f_last = hidden[-1][0].shape[1]
        while len(hidden) < max_hidden:
            hidden.append((jnp.eye(f_last, dtype=jnp.float32),
                           jnp.zeros((1, f_last), jnp.float32)))
        aligned.append(hidden + [final])

    n_layers = max_hidden + 1
    stacked = []
    for l in range(n_layers):
        ws = [head[l][0] for head in aligned]
        bs = [head[l][1] for head in aligned]
        if l == 0:
            w = jnp.concatenate(ws, axis=1)           # shared input layer
        else:
            w = jax.scipy.linalg.block_diag(*ws)      # independent heads
        b = jnp.concatenate(bs, axis=1)
        stacked.append((w, b))

    # Pad the final layer's outputs so the last matmul / transpose stays on a
    # fully aligned (.., 128) tile; only the useful rows are stored.
    w_f, b_f = stacked[-1]
    out_total = w_f.shape[1]
    assert out_total <= out_pad, "packed head outputs exceed OUT_PAD lanes"
    pad = out_pad - out_total
    stacked[-1] = (jnp.pad(w_f, ((0, 0), (0, pad))),
                   jnp.pad(b_f, ((0, 0), (0, pad))))
    return stacked, out_total


def _split_first_layer(w0, piece_sizes):
    """Split W0 [D_in, H] into per-feature-piece row blocks, rows padded to x8."""
    blocks = []
    off = 0
    for s in piece_sizes:
        blk = w0[off:off + s]
        off += s
        pad = _round8(s) - s
        if pad:
            blk = jnp.pad(blk, ((0, pad), (0, 0)))
        blocks.append(blk)
    assert off == w0.shape[0], "feature pieces do not add up to node inputsize"
    return blocks


def _pad_cols8(a):
    """Pad the last dim of [N, k] up to a multiple of 8 (zero columns)."""
    k = a.shape[1]
    pad = _round8(k) - k
    return a if pad == 0 else jnp.pad(a, ((0, 0), (0, pad)))


# ----------------------------------------------------------------------------
# Fused Pallas kernel: all heads, all layers, for one tile of nodes.
# ----------------------------------------------------------------------------
def _condnet_kernel(n_pieces, n_tail, sigmoid_cols, out_rows, *refs):
    out_ref = refs[-1]
    feat = refs[:n_pieces]                         # per-piece [tile_n, k_p]
    w0 = refs[n_pieces:2 * n_pieces]               # matching [k_p, H] row blocks
    b0_ref = refs[2 * n_pieces]
    tail = refs[2 * n_pieces + 1:-1]               # (W1, b1, ..., W_last, b_last)

    # Layer 0: shared input layer with the feature concat fused in (sum of
    # per-piece matmuls == concat(features) @ W0).
    acc = jnp.dot(feat[0][...], w0[0][...], preferred_element_type=jnp.float32)
    for p in range(1, n_pieces):
        acc = acc + jnp.dot(feat[p][...], w0[p][...],
                            preferred_element_type=jnp.float32)
    h = jnp.maximum(acc + b0_ref[...], 0.0)

    # Hidden + final stacked layers (block-diagonal heads).
    for l in range(n_tail):
        w = tail[2 * l][...]
        b = tail[2 * l + 1][...]
        h = jnp.dot(h, w, preferred_element_type=jnp.float32) + b
        if l < n_tail - 1:
            h = jnp.maximum(h, 0.0)

    # Sigmoid only on the beta lane(s): hoisted constant (1, OUT_PAD) mask.
    lane = jax.lax.broadcasted_iota(jnp.int32, (1, h.shape[-1]), 1)
    h = jnp.where(lane < sigmoid_cols, jax.nn.sigmoid(h), h)

    # Transposed, lane-dense writeback: [out_rows, tile_n] instead of a padded
    # [tile_n, 128] slab (XLU transpose is free here; stores stay unmasked).
    h_t = h.T                                       # [OUT_PAD, tile_n]
    out_ref[...] = h_t[:out_rows, :].astype(out_ref.dtype)


def _choose_tile_n(n):
    """Rows per grid step.

    Large N: biggest tile (512..2048 rows) that still yields >= 4 grid steps
    (cross-step pipelining + work for both v7x TensorCores).  Medium N:
    >= 2 steps.  Small N: one tile, rounded down to a multiple of 128 so any
    remainder is an ordinary partial last block.
    """
    if n <= 128:
        return n
    for t in (2048, 1024, 512):
        if n >= 4 * t:
            return t
    for t in (2048, 1024, 512):
        if n >= 2 * t:
            return t
    return min(2048, (n // 128) * 128)


def condnet_fused_forward(features, w0_blocks, b0, tail_layers,
                          sigmoid_cols, out_rows, tile_n=None):
    n = features[0].shape[0]
    if tile_n is None:
        tile_n = _choose_tile_n(n)
    grid = (pl.cdiv(n, tile_n),)   # ragged last block handled by Pallas masking

    args = []
    in_specs = []
    for f in features:
        in_specs.append(pl.BlockSpec((tile_n, f.shape[1]), lambda i: (i, 0)))
        args.append(f)
    for w in w0_blocks:
        in_specs.append(pl.BlockSpec(w.shape, lambda i: (0, 0)))
        args.append(w)
    in_specs.append(pl.BlockSpec(b0.shape, lambda i: (0, 0)))
    args.append(b0)
    for w, b in tail_layers:
        in_specs.append(pl.BlockSpec(w.shape, lambda i: (0, 0)))
        in_specs.append(pl.BlockSpec(b.shape, lambda i: (0, 0)))
        args += [w, b]

    out_spec = pl.BlockSpec((out_rows, tile_n), lambda i: (0, i))

    kernel = functools.partial(_condnet_kernel, len(features), len(tail_layers),
                               sigmoid_cols, out_rows)
    return pl.pallas_call(
        kernel,
        out_shape=jax.ShapeDtypeStruct((out_rows, n), jnp.float32),
        grid_spec=pltpu.PrefetchScalarGridSpec(
            num_scalar_prefetch=0,
            grid=grid,
            in_specs=in_specs,
            out_specs=out_spec,
        ),
        compiler_params=pltpu.CompilerParams(
            dimension_semantics=("parallel",)),
    )(*args)


# ----------------------------------------------------------------------------
# CondNet forward
# ----------------------------------------------------------------------------
class CondNetPallas:
    def __init__(self, key, config):
        d_in = config["node inputsize"]
        self.d_in = d_in
        self.config = config
        # (name, out_size, features, add_batch_norm, final_sigmoid)
        head_defs = [
            ("beta", 1, config["beta net layers"], False, True),
            ("x", config["x size"], config["x net layers"], True, False),
            ("class pred", config["n classes"], config["node classifer layers"], False, False),
            ("charge pred", config["n charge classes"], config["charge classifier layers"], False, False),
            ("pos pred", 3, config["prod position layers"], False, False),
            ("pt_eta_xhat_yhat_pred", 4, config["ptetaxhatyhat prediction layers"], False, False),
        ]
        # Sigmoid head must be first (it occupies the leading output lanes).
        assert head_defs[0][4] and all(not h[4] for h in head_defs[1:])

        keys = jax.random.split(key, len(head_defs))
        self.raw_heads = []          # (name, specs, params, sigmoid) for reference
        per_head_layers = []
        offsets = {}
        off = 0
        for k, (name, out_size, feats, bn, sig) in zip(keys, head_defs):
            specs, params = build_mlp_specs_and_params(
                k, d_in, out_size, feats, add_batch_norm=bn)
            self.raw_heads.append((name, specs, params, sig))
            per_head_layers.append(_fold_bn(specs, params))
            offsets[name] = (off, off + out_size)
            off += out_size
        self.offsets = offsets
        self.stacked_layers, self.out_total = _stack_heads(per_head_layers, OUT_PAD)
        self.out_rows = _round8(self.out_total)
        self.sigmoid_cols = head_defs[0][1]   # beta output width

    def forward(self, node_data, use_kernel=True):
        # Feature pieces in the torch.cat order: [eta, sinu_phi, cosin_phi,
        # isMuon] (stacked), hidden rep, global rep.
        scalars = jnp.stack(
            [node_data["eta"], node_data["sinu_phi"],
             node_data["cosin_phi"], node_data["isMuon"]], axis=1)
        hidden = node_data["hidden rep"]
        glob = node_data["global rep"]

        out = {}
        if use_kernel:
            pieces = [scalars, hidden, glob]
            sizes = [p.shape[1] for p in pieces]
            assert sum(sizes) == self.d_in
            # Fused concat: W0 is split into row blocks matching the pieces
            # (rows zero-padded to multiples of 8, matching zero-padded piece
            # columns), so no [N, 32] ndata array is ever written to HBM.
            w0, b0 = self.stacked_layers[0]
            w0_blocks = _split_first_layer(w0, sizes)
            feats = [_pad_cols8(p) for p in pieces]
            packed_t = condnet_fused_forward(
                feats, w0_blocks, b0, self.stacked_layers[1:],
                self.sigmoid_cols, self.out_rows)
            # Per-head outputs are contiguous row slices of the [out_rows, N]
            # slab; the transposes back to [N, k] are tiny (k <= 4).
            for name, (lo, hi) in self.offsets.items():
                out[name] = packed_t[lo:hi, :].T
        else:
            ndata = jnp.concatenate([scalars, hidden, glob], axis=1)
            for name, specs, params, sig in self.raw_heads:
                out[name] = mlp_reference(ndata, specs, params, final_sigmoid=sig)
        out["beta"] = out["beta"].reshape(-1)   # .view(-1)
        return out


def _make_node_data(key, n, hidden_rep, global_rep):
    k_eta, k_phi, k_mu, k_hid, k_glob = jax.random.split(key, 5)
    phi = jax.random.uniform(k_phi, (n,), jnp.float32, -3.14159, 3.14159)
    return {
        "eta": jax.random.normal(k_eta, (n,), jnp.float32),
        "sinu_phi": jnp.sin(phi),
        "cosin_phi": jnp.cos(phi),
        "isMuon": (jax.random.uniform(k_mu, (n,)) > 0.9).astype(jnp.float32),
        "hidden rep": jax.random.normal(k_hid, (n, hidden_rep), jnp.float32),
        "global rep": jax.random.normal(k_glob, (n, global_rep), jnp.float32),
    }


if __name__ == "__main__":
    # Small synthetic config consistent with the module's forward pass.
    HIDDEN_REP = 12
    GLOBAL_REP = 16
    config = {
        "node inputsize": 4 + HIDDEN_REP + GLOBAL_REP,  # eta,sin,cos,isMuon + reps = 32
        "x size": 3,
        "n classes": 4,
        "n charge classes": 3,
        "beta net layers": [32, 32],
        "x net layers": [32, 32],
        "node classifer layers": [32],
        "charge classifier layers": [32],
        "ptetaxhatyhat prediction layers": [32, 32],
        "prod position layers": [32],
    }

    key = jax.random.PRNGKey(0)
    k_param, k_data1, k_data2 = jax.random.split(key, 3)
    net = CondNetPallas(k_param, config)

    # Case 1: N divisible by the tile (single exact block).
    # Case 2: ragged N (exercises the cdiv grid / masked partial last block).
    for n_nodes, k_data in ((256, k_data1), (300, k_data2)):
        node_data = _make_node_data(k_data, n_nodes, HIDDEN_REP, GLOBAL_REP)

        out_kernel = net.forward(node_data, use_kernel=True)
        jax.block_until_ready(out_kernel)
        out_ref = net.forward(node_data, use_kernel=False)

        for name in out_kernel:
            ok = jnp.allclose(out_kernel[name], out_ref[name], atol=1e-4, rtol=1e-3)
            assert bool(ok), f"mismatch in {name} (N={n_nodes})"

        # shape sanity checks matching the torch module
        assert out_kernel["beta"].shape == (n_nodes,)
        assert out_kernel["x"].shape == (n_nodes, config["x size"])
        assert out_kernel["class pred"].shape == (n_nodes, config["n classes"])
        assert out_kernel["charge pred"].shape == (n_nodes, config["n charge classes"])
        assert out_kernel["pos pred"].shape == (n_nodes, 3)
        assert out_kernel["pt_eta_xhat_yhat_pred"].shape == (n_nodes, 4)

    print("KERNEL_OK")
</pallas_src>

<mosaic_0001>
module attributes {stable_mosaic.version = 11 : i64} {
  func.func @_condnet_kernel(%arg0: i32, %arg1: memref<256x8xf32, #tpu.memory_space<vmem>>, %arg2: memref<256x16xf32, #tpu.memory_space<vmem>>, %arg3: memref<256x16xf32, #tpu.memory_space<vmem>>, %arg4: memref<8x192xf32, #tpu.memory_space<vmem>>, %arg5: memref<16x192xf32, #tpu.memory_space<vmem>>, %arg6: memref<16x192xf32, #tpu.memory_space<vmem>>, %arg7: memref<1x192xf32, #tpu.memory_space<vmem>>, %arg8: memref<192x192xf32, #tpu.memory_space<vmem>>, %arg9: memref<1x192xf32, #tpu.memory_space<vmem>>, %arg10: memref<192x128xf32, #tpu.memory_space<vmem>>, %arg11: memref<1x128xf32, #tpu.memory_space<vmem>>, %arg12: memref<24x256xf32, #tpu.memory_space<vmem>>) attributes {dimension_semantics = [#tpu.dimension_semantics<parallel>], iteration_bounds = array<i64: 1>, scalar_prefetch = 0 : i64, scratch_operands = 0 : i64, tpu.core_type = #tpu.core_type<tc>, window_params = [{transform_indices = @transform_0, window_bounds = array<i64: 256, 8>}, {transform_indices = @transform_1, window_bounds = array<i64: 256, 16>}, {transform_indices = @transform_2, window_bounds = array<i64: 256, 16>}, {pipeline_mode = #tpu.pipeline_mode<synchronous>, transform_indices = @transform_3, window_bounds = array<i64: 8, 192>}, {pipeline_mode = #tpu.pipeline_mode<synchronous>, transform_indices = @transform_4, window_bounds = array<i64: 16, 192>}, {pipeline_mode = #tpu.pipeline_mode<synchronous>, transform_indices = @transform_5, window_bounds = array<i64: 16, 192>}, {pipeline_mode = #tpu.pipeline_mode<synchronous>, transform_indices = @transform_6, window_bounds = array<i64: 1, 192>}, {pipeline_mode = #tpu.pipeline_mode<synchronous>, transform_indices = @transform_7, window_bounds = array<i64: 192, 192>}, {pipeline_mode = #tpu.pipeline_mode<synchronous>, transform_indices = @transform_8, window_bounds = array<i64: 1, 192>}, {pipeline_mode = #tpu.pipeline_mode<synchronous>, transform_indices = @transform_9, window_bounds = array<i64: 192, 128>}, {pipeline_mode = #tpu.pipeline_mode<synchronous>, transform_indices = @transform_10, window_bounds = array<i64: 1, 128>}, {transform_indices = @transform_11, window_bounds = array<i64: 24, 256>}]} {
    %c0 = arith.constant 0 : index
    %c0_0 = arith.constant 0 : index
    %0 = vector.load %arg1[%c0, %c0_0] : memref<256x8xf32, #tpu.memory_space<vmem>>, vector<256x8xf32>
    %c0_1 = arith.constant 0 : index
    %c0_2 = arith.constant 0 : index
    %1 = vector.load %arg4[%c0_1, %c0_2] : memref<8x192xf32, #tpu.memory_space<vmem>>, vector<8x192xf32>
    %cst = arith.constant dense<0.000000e+00> : vector<256x192xf32>
    %2 = tpu.matmul %0, %1, %cst {dimension_numbers = #tpu.dot_dimension_numbers<[1], [0], [0], [1], [0, 0, 1, 1], [], []>} : vector<256x8xf32>, vector<8x192xf32>, vector<256x192xf32> -> vector<256x192xf32>
    %c0_3 = arith.constant 0 : index
    %c0_4 = arith.constant 0 : index
    %3 = vector.load %arg2[%c0_3, %c0_4] : memref<256x16xf32, #tpu.memory_space<vmem>>, vector<256x16xf32>
    %c0_5 = arith.constant 0 : index
    %c0_6 = arith.constant 0 : index
    %4 = vector.load %arg5[%c0_5, %c0_6] : memref<16x192xf32, #tpu.memory_space<vmem>>, vector<16x192xf32>
    %cst_7 = arith.constant dense<0.000000e+00> : vector<256x192xf32>
    %5 = tpu.matmul %3, %4, %cst_7 {dimension_numbers = #tpu.dot_dimension_numbers<[1], [0], [0], [1], [0, 0, 1, 1], [], []>} : vector<256x16xf32>, vector<16x192xf32>, vector<256x192xf32> -> vector<256x192xf32>
    %6 = arith.addf %2, %5 : vector<256x192xf32>
    %c0_8 = arith.constant 0 : index
    %c0_9 = arith.constant 0 : index
    %7 = vector.load %arg3[%c0_8, %c0_9] : memref<256x16xf32, #tpu.memory_space<vmem>>, vector<256x16xf32>
    %c0_10 = arith.constant 0 : index
    %c0_11 = arith.constant 0 : index
    %8 = vector.load %arg6[%c0_10, %c0_11] : memref<16x192xf32, #tpu.memory_space<vmem>>, vector<16x192xf32>
    %cst_12 = arith.constant dense<0.000000e+00> : vector<256x192xf32>
    %9 = tpu.matmul %7, %8, %cst_12 {dimension_numbers = #tpu.dot_dimension_numbers<[1], [0], [0], [1], [0, 0, 1, 1], [], []>} : vector<256x16xf32>, vector<16x192xf32>, vector<256x192xf32> -> vector<256x192xf32>
    %10 = arith.addf %6, %9 : vector<256x192xf32>
    %c0_13 = arith.constant 0 : index
    %c0_14 = arith.constant 0 : index
    %11 = vector.load %arg7[%c0_13, %c0_14] : memref<1x192xf32, #tpu.memory_space<vmem>>, vector<1x192xf32>
    %12 = vector.broadcast %11 : vector<1x192xf32> to vector<256x192xf32>
    %13 = arith.addf %10, %12 : vector<256x192xf32>
    %cst_15 = arith.constant 0.000000e+00 : f32
    %14 = vector.broadcast %cst_15 : f32 to vector<256x192xf32>
    %15 = arith.maximumf %13, %14 : vector<256x192xf32>
    %c0_16 = arith.constant 0 : index
    %c0_17 = arith.constant 0 : index
    %16 = vector.load %arg8[%c0_16, %c0_17] : memref<192x192xf32, #tpu.memory_space<vmem>>, vector<192x192xf32>
    %c0_18 = arith.constant 0 : index
    %c0_19 = arith.constant 0 : index
    %17 = vector.load %arg9[%c0_18, %c0_19] : memref<1x192xf32, #tpu.memory_space<vmem>>, vector<1x192xf32>
    %cst_20 = arith.constant dense<0.000000e+00> : vector<256x192xf32>
    %18 = tpu.matmul %15, %16, %cst_20 {dimension_numbers = #tpu.dot_dimension_numbers<[1], [0], [0], [1], [0, 0, 1, 1], [], []>} : vector<256x192xf32>, vector<192x192xf32>, vector<256x192xf32> -> vector<256x192xf32>
    %19 = vector.broadcast %17 : vector<1x192xf32> to vector<256x192xf32>
    %20 = arith.addf %18, %19 : vector<256x192xf32>
    %cst_21 = arith.constant 0.000000e+00 : f32
    %21 = vector.broadcast %cst_21 : f32 to vector<256x192xf32>
    %22 = arith.maximumf %20, %21 : vector<256x192xf32>
    %c0_22 = arith.constant 0 : index
    %c0_23 = arith.constant 0 : index
    %23 = vector.load %arg10[%c0_22, %c0_23] : memref<192x128xf32, #tpu.memory_space<vmem>>, vector<192x128xf32>
    %c0_24 = arith.constant 0 : index
    %c0_25 = arith.constant 0 : index
    %24 = vector.load %arg11[%c0_24, %c0_25] : memref<1x128xf32, #tpu.memory_space<vmem>>, vector<1x128xf32>
    %cst_26 = arith.constant dense<0.000000e+00> : vector<256x128xf32>
    %25 = tpu.matmul %22, %23, %cst_26 {dimension_numbers = #tpu.dot_dimension_numbers<[1], [0], [0], [1], [0, 0, 1, 1], [], []>} : vector<256x192xf32>, vector<192x128xf32>, vector<256x128xf32> -> vector<256x128xf32>
    %26 = vector.broadcast %24 : vector<1x128xf32> to vector<256x128xf32>
    %27 = arith.addf %25, %26 : vector<256x128xf32>
    %28 = tpu.iota {dimensions = array<i32: 1>} : vector<1x128xi32>
    %c1_i32 = arith.constant 1 : i32
    %29 = vector.broadcast %c1_i32 : i32 to vector<1x128xi32>
    %30 = arith.cmpi slt, %28, %29 : vector<1x128xi32>
    %31 = arith.negf %27 : vector<256x128xf32>
    %32 = math.exp %31 : vector<256x128xf32>
    %cst_27 = arith.constant 1.000000e+00 : f32
    %33 = vector.broadcast %cst_27 : f32 to vector<256x128xf32>
    %34 = arith.addf %33, %32 : vector<256x128xf32>
    %35 = arith.divf %33, %34 : vector<256x128xf32>
    %36 = vector.shape_cast %30 : vector<1x128xi1> to vector<1x128xi1>
    %37 = vector.broadcast %36 : vector<1x128xi1> to vector<256x128xi1>
    %38 = arith.select %37, %35, %27 : vector<256x128xi1>, vector<256x128xf32>
    %39 = tpu.transpose %38, [1, 0] : vector<256x128xf32> -> vector<128x256xf32>
    %40 = vector.extract_strided_slice %39 {offsets = [0, 0], sizes = [24, 256], strides = [1, 1]} : vector<128x256xf32> to vector<24x256xf32>
    %c0_28 = arith.constant 0 : index
    %c0_29 = arith.constant 0 : index
    %41 = vector.load %arg12[%c0_28, %c0_29] : memref<24x256xf32, #tpu.memory_space<vmem>>, vector<24x256xf32>
    tpu.vector_store %arg12[%c0_28, %c0_29], %40 {strides = array<i32>} : memref<24x256xf32, #tpu.memory_space<vmem>>, vector<24x256xf32>,
    return
  }
  func.func @transform_0(%arg0: i32) -> (i32, i32) {
    %c0_i32 = arith.constant 0 : i32
    %c0_i32_0 = arith.constant 0 : i32
    return %arg0, %c0_i32 : i32, i32
  }
  func.func @transform_1(%arg0: i32) -> (i32, i32) {
    %c0_i32 = arith.constant 0 : i32
    %c0_i32_0 = arith.constant 0 : i32
    return %arg0, %c0_i32 : i32, i32
  }
  func.func @transform_2(%arg0: i32) -> (i32, i32) {
    %c0_i32 = arith.constant 0 : i32
    %c0_i32_0 = arith.constant 0 : i32
    return %arg0, %c0_i32 : i32, i32
  }
  func.func @transform_3(%arg0: i32) -> (i32, i32) {
    %c0_i32 = arith.constant 0 : i32
    %c0_i32_0 = arith.constant 0 : i32
    %c0_i32_1 = arith.constant 0 : i32
    return %c0_i32, %c0_i32_0 : i32, i32
  }
  func.func @transform_4(%arg0: i32) -> (i32, i32) {
    %c0_i32 = arith.constant 0 : i32
    %c0_i32_0 = arith.constant 0 : i32
    %c0_i32_1 = arith.constant 0 : i32
    return %c0_i32, %c0_i32_0 : i32, i32
  }
  func.func @transform_5(%arg0: i32) -> (i32, i32) {
    %c0_i32 = arith.constant 0 : i32
    %c0_i32_0 = arith.constant 0 : i32
    %c0_i32_1 = arith.constant 0 : i32
    return %c0_i32, %c0_i32_0 : i32, i32
  }
  func.func @transform_6(%arg0: i32) -> (i32, i32) {
    %c0_i32 = arith.constant 0 : i32
    %c0_i32_0 = arith.constant 0 : i32
    %c0_i32_1 = arith.constant 0 : i32
    return %c0_i32, %c0_i32_0 : i32, i32
  }
  func.func @transform_7(%arg0: i32) -> (i32, i32) {
    %c0_i32 = arith.constant 0 : i32
    %c0_i32_0 = arith.constant 0 : i32
    %c0_i32_1 = arith.constant 0 : i32
    return %c0_i32, %c0_i32_0 : i32, i32
  }
  func.func @transform_8(%arg0: i32) -> (i32, i32) {
    %c0_i32 = arith.constant 0 : i32
    %c0_i32_0 = arith.constant 0 : i32
    %c0_i32_1 = arith.constant 0 : i32
    return %c0_i32, %c0_i32_0 : i32, i32
  }
  func.func @transform_9(%arg0: i32) -> (i32, i32) {
    %c0_i32 = arith.constant 0 : i32
    %c0_i32_0 = arith.constant 0 : i32
    %c0_i32_1 = arith.constant 0 : i32
    return %c0_i32, %c0_i32_0 : i32, i32
  }
  func.func @transform_10(%arg0: i32) -> (i32, i32) {
    %c0_i32 = arith.constant 0 : i32
    %c0_i32_0 = arith.constant 0 : i32
    %c0_i32_1 = arith.constant 0 : i32
    return %c0_i32, %c0_i32_0 : i32, i32
  }
  func.func @transform_11(%arg0: i32) -> (i32, i32) {
    %c0_i32 = arith.constant 0 : i32
    %c0_i32_0 = arith.constant 0 : i32
    return %c0_i32, %arg0 : i32, i32
  }
}

</mosaic_0001>

<llo_original>
// kernel: tpu_custom_call.1
$region0: #{tpu_custom_call.1}
  #allocation0 [shape = 'u32[]', space=smem, size = 0x4, offset = 0x4, fixed_abs, tag = 'smem constant byte address 0x4 - core index']
  #allocation1 [shape = 'u32[72,128]{1,0:T(1,128)}', space=vmem, size = 0x9000, scoped, tag = 'internal scratch']
  %s0 = inlined_call_operand.vmem [shape: f32[256,8], index: 0, kind: input, shape index: {}]
  %s1 = inlined_call_operand.vmem [shape: f32[256,16], index: 1, kind: input, shape index: {}]
  %s2 = inlined_call_operand.vmem [shape: f32[256,16], index: 2, kind: input, shape index: {}]
  %s3 = inlined_call_operand.vmem [shape: f32[8,192], index: 3, kind: input, shape index: {}]
  %s4 = inlined_call_operand.vmem [shape: f32[16,192], index: 4, kind: input, shape index: {}]
  %s5 = inlined_call_operand.vmem [shape: f32[16,192], index: 5, kind: input, shape index: {}]
  %s6 = inlined_call_operand.vmem [shape: f32[1,192], index: 6, kind: input, shape index: {}]
  %s7 = inlined_call_operand.vmem [shape: f32[192,192], index: 7, kind: input, shape index: {}]
  %s8 = inlined_call_operand.vmem [shape: f32[1,192], index: 8, kind: input, shape index: {}]
  %s9 = inlined_call_operand.vmem [shape: f32[192,128], index: 9, kind: input, shape index: {}]
  %s10 = inlined_call_operand.vmem [shape: f32[1,128], index: 10, kind: input, shape index: {}]
  %s11 = inlined_call_operand.hbm [shape: f32[24,256], index: 11, kind: output, shape index: {}]
  %s12 = sld [smem:[#allocation0]]
  $region54: #{tpu_custom_call.1} parent=0
    _
  %s14 = ssub.s32 1, %s12
  %s15 = scalar_select 0, %s14, %s12
  $region1: #{tpu_custom_call.1} parent=0
    #allocation2 [shape = 'u8[24576]{0}', space=vmem, size = 0x6000, scoped, tag = 'output window, operand 0, single buffered']
    #allocation3 [shape = 's32[1]{0}', space=sflag, size = 0x4, scoped, tag = 'scoped memory for tpu_custom_call.1']
    %16 = vsyncpa [#allocation3], 0
    // Predicated region
    $region2: #{tpu_custom_call.1} parent=1 // pred_check
      _
    $region3: #{tpu_custom_call.1} parent=1 // pred_check_branch
      %18 = sbr.rel (0) target = $region5
    $region4: #{tpu_custom_call.1} parent=1 // pred_region
      _
    $region5: #{tpu_custom_call.1} parent=1 // pred_fallthru
      _
    // Predicated region
    $region6: #{tpu_custom_call.1} parent=1 // pred_check
      _
    $region7: #{tpu_custom_call.1} parent=1 // pred_check_branch
      %20 = sbr.rel (0) target = $region9
    $region8: #{tpu_custom_call.1} parent=1 // pred_region
      _
    $region9: #{tpu_custom_call.1} parent=1 // pred_fallthru
      _
    // Predicated region
    $region10: #{tpu_custom_call.1} parent=1 // pred_check
      _
    $region11: #{tpu_custom_call.1} parent=1 // pred_check_branch
      %22 = sbr.rel (0) target = $region13
    $region12: #{tpu_custom_call.1} parent=1 // pred_region
      _
    $region13: #{tpu_custom_call.1} parent=1 // pred_fallthru
      _
    // Predicated region
    $region14: #{tpu_custom_call.1} parent=1 // pred_check
      _
    $region15: #{tpu_custom_call.1} parent=1 // pred_check_branch
      %24 = sbr.rel (0) target = $region17
    $region16: #{tpu_custom_call.1} parent=1 // pred_region
      _
    $region17: #{tpu_custom_call.1} parent=1 // pred_fallthru
      _
    // Predicated region
    $region18: #{tpu_custom_call.1} parent=1 // pred_check
      _
    $region19: #{tpu_custom_call.1} parent=1 // pred_check_branch
      %26 = sbr.rel (0) target = $region21
    $region20: #{tpu_custom_call.1} parent=1 // pred_region
      _
    $region21: #{tpu_custom_call.1} parent=1 // pred_fallthru
      _
    // Predicated region
    $region22: #{tpu_custom_call.1} parent=1 // pred_check
      _
    $region23: #{tpu_custom_call.1} parent=1 // pred_check_branch
      %28 = sbr.rel (0) target = $region25
    $region24: #{tpu_custom_call.1} parent=1 // pred_region
      _
    $region25: #{tpu_custom_call.1} parent=1 // pred_fallthru
      _
    // Predicated region
    $region26: #{tpu_custom_call.1} parent=1 // pred_check
      _
    $region27: #{tpu_custom_call.1} parent=1 // pred_check_branch
      %30 = sbr.rel (0) target = $region29
    $region28: #{tpu_custom_call.1} parent=1 // pred_region
      _
    $region29: #{tpu_custom_call.1} parent=1 // pred_fallthru
      _
    // Predicated region
    $region30: #{tpu_custom_call.1} parent=1 // pred_check
      _
    $region31: #{tpu_custom_call.1} parent=1 // pred_check_branch
      %32 = sbr.rel (0) target = $region33
    $region32: #{tpu_custom_call.1} parent=1 // pred_region
      _
    $region33: #{tpu_custom_call.1} parent=1 // pred_fallthru
      _
    // Predicated region
    $region34: #{tpu_custom_call.1} parent=1 // pred_check
      _
    $region35: #{tpu_custom_call.1} parent=1 // pred_check_branch
      %34 = sbr.rel (0) target = $region37
    $region36: #{tpu_custom_call.1} parent=1 // pred_region
      _
    $region37: #{tpu_custom_call.1} parent=1 // pred_fallthru
      _
    // Predicated region
    $region38: #{tpu_custom_call.1} parent=1 // pred_check
      _
    $region39: #{tpu_custom_call.1} parent=1 // pred_check_branch
      %36 = sbr.rel (0) target = $region41
    $region40: #{tpu_custom_call.1} parent=1 // pred_region
      _
    $region41: #{tpu_custom_call.1} parent=1 // pred_fallthru
      _
    // Predicated region
    $region42: #{tpu_custom_call.1} parent=1 // pred_check
      _
    $region43: #{tpu_custom_call.1} parent=1 // pred_check_branch
      %38 = sbr.rel (0) target = $region45
    $region44: #{tpu_custom_call.1} parent=1 // pred_region
      _
    $region45: #{tpu_custom_call.1} parent=1 // pred_fallthru
      _
    %v39 = vld [vmem:[%s0] sm:$0xff]
    %v40 = vld [vmem:[%s0 + $0x8] sm:$0xff]
    %v41 = vld [vmem:[%s0 + $0x10] sm:$0xff]
    %v42 = vld [vmem:[%s0 + $0x18] sm:$0xff]
    %v43 = vld [vmem:[%s0 + $0x20] sm:$0xff]
    %v44 = vld [vmem:[%s0 + $0x28] sm:$0xff]
    %v45 = vld [vmem:[%s0 + $0x30] sm:$0xff]
    %v46 = vld [vmem:[%s0 + $0x38] sm:$0xff]
    %v47 = vld [vmem:[%s0 + $0x40] sm:$0xff]
    %v48 = vld [vmem:[%s0 + $0x48] sm:$0xff]
    %v49 = vld [vmem:[%s0 + $0x50] sm:$0xff]
    %v50 = vld [vmem:[%s0 + $0x58] sm:$0xff]
    %v51 = vld [vmem:[%s0 + $0x60] sm:$0xff]
    %v52 = vld [vmem:[%s0 + $0x68] sm:$0xff]
    %v53 = vld [vmem:[%s0 + $0x70] sm:$0xff]
    %v54 = vld [vmem:[%s0 + $0x78] sm:$0xff]
    %v55 = vld [vmem:[%s0 + $0x80] sm:$0xff]
    %v56 = vld [vmem:[%s0 + $0x88] sm:$0xff]
    %v57 = vld [vmem:[%s0 + $0x90] sm:$0xff]
    %v58 = vld [vmem:[%s0 + $0x98] sm:$0xff]
    %v59 = vld [vmem:[%s0 + $0xa0] sm:$0xff]
    %v60 = vld [vmem:[%s0 + $0xa8] sm:$0xff]
    %v61 = vld [vmem:[%s0 + $0xb0] sm:$0xff]
    %v62 = vld [vmem:[%s0 + $0xb8] sm:$0xff]
    %v63 = vld [vmem:[%s0 + $0xc0] sm:$0xff]
    %v64 = vld [vmem:[%s0 + $0xc8] sm:$0xff]
    %v65 = vld [vmem:[%s0 + $0xd0] sm:$0xff]
    %v66 = vld [vmem:[%s0 + $0xd8] sm:$0xff]
    %v67 = vld [vmem:[%s0 + $0xe0] sm:$0xff]
    %v68 = vld [vmem:[%s0 + $0xe8] sm:$0xff]
    %v69 = vld [vmem:[%s0 + $0xf0] sm:$0xff]
    %v70 = vld [vmem:[%s0 + $0xf8] sm:$0xff]
    %v71 = vld [vmem:[%s3] sm:$0xff]
    %v72 = vld [vmem:[%s3 + $0x8] sm:$0xff]
    %v73 = vld [vmem:[%s1] sm:$0xff]
    %v74 = vld [vmem:[%s1 + $0x8] sm:$0xff]
    %v75 = vld [vmem:[%s1 + $0x10] sm:$0xff]
    %v76 = vld [vmem:[%s1 + $0x18] sm:$0xff]
    %v77 = vld [vmem:[%s1 + $0x20] sm:$0xff]
    %v78 = vld [vmem:[%s1 + $0x28] sm:$0xff]
    %v79 = vld [vmem:[%s1 + $0x30] sm:$0xff]
    %v80 = vld [vmem:[%s1 + $0x38] sm:$0xff]
    %v81 = vld [vmem:[%s1 + $0x40] sm:$0xff]
    %v82 = vld [vmem:[%s1 + $0x48] sm:$0xff]
    %v83 = vld [vmem:[%s1 + $0x50] sm:$0xff]
    %v84 = vld [vmem:[%s1 + $0x58] sm:$0xff]
    %v85 = vld [vmem:[%s1 + $0x60] sm:$0xff]
    %v86 = vld [vmem:[%s1 + $0x68] sm:$0xff]
    %v87 = vld [vmem:[%s1 + $0x70] sm:$0xff]
    %v88 = vld [vmem:[%s1 + $0x78] sm:$0xff]
    %v89 = vld [vmem:[%s1 + $0x80] sm:$0xff]
    %v90 = vld [vmem:[%s1 + $0x88] sm:$0xff]
    %v91 = vld [vmem:[%s1 + $0x90] sm:$0xff]
    %v92 = vld [vmem:[%s1 + $0x98] sm:$0xff]
    %v93 = vld [vmem:[%s1 + $0xa0] sm:$0xff]
    %v94 = vld [vmem:[%s1 + $0xa8] sm:$0xff]
    %v95 = vld [vmem:[%s1 + $0xb0] sm:$0xff]
    %v96 = vld [vmem:[%s1 + $0xb8] sm:$0xff]
    %v97 = vld [vmem:[%s1 + $0xc0] sm:$0xff]
    %v98 = vld [vmem:[%s1 + $0xc8] sm:$0xff]
    %v99 = vld [vmem:[%s1 + $0xd0] sm:$0xff]
    %v100 = vld [vmem:[%s1 + $0xd8] sm:$0xff]
    %v101 = vld [vmem:[%s1 + $0xe0] sm:$0xff]
    %v102 = vld [vmem:[%s1 + $0xe8] sm:$0xff]
    %v103 = vld [vmem:[%s1 + $0xf0] sm:$0xff]
    %v104 = vld [vmem:[%s1 + $0xf8] sm:$0xff]
    %v105 = vld [vmem:[%s4] sm:$0xff]
    %v106 = vld [vmem:[%s4 + $0x8] sm:$0xff]
    %v107 = vld [vmem:[%s4 + $0x10] sm:$0xff]
    %v108 = vld [vmem:[%s4 + $0x18] sm:$0xff]
    %vm109 = vcmask 130048
    %v111 = vsel %vm109, %v73, 0
    %v114 = vsel %vm109, %v74, 0
    %v117 = vsel %vm109, %v75, 0
    %v120 = vsel %vm109, %v76, 0
    %v123 = vsel %vm109, %v77, 0
    %v126 = vsel %vm109, %v78, 0
    %v129 = vsel %vm109, %v79, 0
    %v132 = vsel %vm109, %v80, 0
    %v135 = vsel %vm109, %v81, 0
    %v138 = vsel %vm109, %v82, 0
    %v141 = vsel %vm109, %v83, 0
    %v144 = vsel %vm109, %v84, 0
    %v147 = vsel %vm109, %v85, 0
    %v150 = vsel %vm109, %v86, 0
    %v153 = vsel %vm109, %v87, 0
    %v156 = vsel %vm109, %v88, 0
    %v159 = vsel %vm109, %v89, 0
    %v162 = vsel %vm109, %v90, 0
    %v165 = vsel %vm109, %v91, 0
    %v168 = vsel %vm109, %v92, 0
    %v171 = vsel %vm109, %v93, 0
    %v174 = vsel %vm109, %v94, 0
    %v177 = vsel %vm109, %v95, 0
    %v180 = vsel %vm109, %v96, 0
    %v183 = vsel %vm109, %v97, 0
    %v186 = vsel %vm109, %v98, 0
    %v189 = vsel %vm109, %v99, 0
    %v192 = vsel %vm109, %v100, 0
    %v195 = vsel %vm109, %v101, 0
    %v198 = vsel %vm109, %v102, 0
    %v201 = vsel %vm109, %v103, 0
    %v204 = vsel %vm109, %v104, 0
    %206 = vmatpush.msra.mxu0 0.0
    %207 = vmatpush.msra.mxu0 0.0
    %208 = vmatpush.msra.mxu0 0.0
    %209 = vmatpush.msra.mxu0 0.0
    %210 = vmatpush.msra.mxu0 0.0
    %211 = vmatpush.msra.mxu0 0.0
    %212 = vmatpush.msra.mxu0 0.0
    %213 = vmatpush.msra.mxu0 0.0
    %214 = vmatpush.msra.mxu0 0.0
    %215 = vmatpush.msra.mxu0 0.0
    %216 = vmatpush.msra.mxu0 0.0
    %217 = vmatpush.msra.mxu0 0.0
    %218 = vmatpush.msra.mxu0 0.0
    %219 = vmatpush.msra.mxu0 0.0
    %220 = vmatpush.msra.mxu0 %v107
    %221 = vmatpush.msra.mxu0 %v105
    %222 = vmatmul.f32.gmra.mxu0 %v111
    %v223 = vpop.f32.mrf.mxu0
    %v224 = vadd.f32 0.0, %v223
    %225 = vmatmul.f32.gmra.mxu0 %v114
    %v226 = vpop.f32.mrf.mxu0
    %v227 = vadd.f32 0.0, %v226
    %228 = vmatmul.f32.gmra.mxu0 %v117
    %v229 = vpop.f32.mrf.mxu0
    %v230 = vadd.f32 0.0, %v229
    %231 = vmatmul.f32.gmra.mxu0 %v120
    %v232 = vpop.f32.mrf.mxu0
    %v233 = vadd.f32 0.0, %v232
    %234 = vmatmul.f32.gmra.mxu0 %v123
    %v235 = vpop.f32.mrf.mxu0
    %v236 = vadd.f32 0.0, %v235
    %237 = vmatmul.f32.gmra.mxu0 %v126
    %v238 = vpop.f32.mrf.mxu0
    %v239 = vadd.f32 0.0, %v238
    %240 = vmatmul.f32.gmra.mxu0 %v129
    %v241 = vpop.f32.mrf.mxu0
    %v242 = vadd.f32 0.0, %v241
    %243 = vmatmul.f32.gmra.mxu0 %v132
    %v244 = vpop.f32.mrf.mxu0
    %v245 = vadd.f32 0.0, %v244
    %246 = vmatmul.f32.gmra.mxu0 %v135
    %v247 = vpop.f32.mrf.mxu0
    %v248 = vadd.f32 0.0, %v247
    %249 = vmatmul.f32.gmra.mxu0 %v138
    %v250 = vpop.f32.mrf.mxu0
    %v251 = vadd.f32 0.0, %v250
    %252 = vmatmul.f32.gmra.mxu0 %v141
    %v253 = vpop.f32.mrf.mxu0
    %v254 = vadd.f32 0.0, %v253
    %255 = vmatmul.f32.gmra.mxu0 %v144
    %v256 = vpop.f32.mrf.mxu0
    %v257 = vadd.f32 0.0, %v256
    %258 = vmatmul.f32.gmra.mxu0 %v147
    %v259 = vpop.f32.mrf.mxu0
    %v260 = vadd.f32 0.0, %v259
    %261 = vmatmul.f32.gmra.mxu0 %v150
    %v262 = vpop.f32.mrf.mxu0
    %v263 = vadd.f32 0.0, %v262
    %264 = vmatmul.f32.gmra.mxu0 %v153
    %v265 = vpop.f32.mrf.mxu0
    %v266 = vadd.f32 0.0, %v265
    %267 = vmatmul.f32.gmra.mxu0 %v156
    %v268 = vpop.f32.mrf.mxu0
    %v269 = vadd.f32 0.0, %v268
    %270 = vmatmul.f32.gmra.mxu0 %v159
    %v271 = vpop.f32.mrf.mxu0
    %v272 = vadd.f32 0.0, %v271
    %273 = vmatmul.f32.gmra.mxu0 %v162
    %v274 = vpop.f32.mrf.mxu0
    %v275 = vadd.f32 0.0, %v274
    %276 = vmatmul.f32.gmra.mxu0 %v165
    %v277 = vpop.f32.mrf.mxu0
    %v278 = vadd.f32 0.0, %v277
    %279 = vmatmul.f32.gmra.mxu0 %v168
    %v280 = vpop.f32.mrf.mxu0
    %v281 = vadd.f32 0.0, %v280
    %282 = vmatmul.f32.gmra.mxu0 %v171
    %v283 = vpop.f32.mrf.mxu0
    %v284 = vadd.f32 0.0, %v283
    %285 = vmatmul.f32.gmra.mxu0 %v174
    %v286 = vpop.f32.mrf.mxu0
    %v287 = vadd.f32 0.0, %v286
    %288 = vmatmul.f32.gmra.mxu0 %v177
    %v289 = vpop.f32.mrf.mxu0
    %v290 = vadd.f32 0.0, %v289
    %291 = vmatmul.f32.gmra.mxu0 %v180
    %v292 = vpop.f32.mrf.mxu0
    %v293 = vadd.f32 0.0, %v292
    %294 = vmatmul.f32.gmra.mxu0 %v183
    %v295 = vpop.f32.mrf.mxu0
    %v296 = vadd.f32 0.0, %v295
    %297 = vmatmul.f32.gmra.mxu0 %v186
    %v298 = vpop.f32.mrf.mxu0
    %v299 = vadd.f32 0.0, %v298
    %300 = vmatmul.f32.gmra.mxu0 %v189
    %v301 = vpop.f32.mrf.mxu0
    %v302 = vadd.f32 0.0, %v301
    %303 = vmatmul.f32.gmra.mxu0 %v192
    %v304 = vpop.f32.mrf.mxu0
    %v305 = vadd.f32 0.0, %v304
    %306 = vmatmul.f32.gmra.mxu0 %v195
    %v307 = vpop.f32.mrf.mxu0
    %v308 = vadd.f32 0.0, %v307
    %309 = vmatmul.f32.gmra.mxu0 %v198
    %v310 = vpop.f32.mrf.mxu0
    %v311 = vadd.f32 0.0, %v310
    %312 = vmatmul.f32.gmra.mxu0 %v201
    %v313 = vpop.f32.mrf.mxu0
    %v314 = vadd.f32 0.0, %v313
    %315 = vmatmul.f32.gmra.mxu0 %v204
    %v316 = vpop.f32.mrf.mxu0
    %v317 = vadd.f32 0.0, %v316
    %318 = vdwg.mxu0
    %319 = vmatpush.msra.mxu0 0.0
    %320 = vmatpush.msra.mxu0 0.0
    %321 = vmatpush.msra.mxu0 0.0
    %322 = vmatpush.msra.mxu0 0.0
    %323 = vmatpush.msra.mxu0 0.0
    %324 = vmatpush.msra.mxu0 0.0
    %325 = vmatpush.msra.mxu0 0.0
    %326 = vmatpush.msra.mxu0 0.0
    %327 = vmatpush.msra.mxu0 0.0
    %328 = vmatpush.msra.mxu0 0.0
    %329 = vmatpush.msra.mxu0 0.0
    %330 = vmatpush.msra.mxu0 0.0
    %331 = vmatpush.msra.mxu0 0.0
    %332 = vmatpush.msra.mxu0 0.0
    %333 = vmatpush.msra.mxu0 %v108
    %334 = vmatpush.msra.mxu0 %v106
    %335 = vmatmul.f32.gmra.mxu0 %v111
    %v336 = vpop.f32.mrf.mxu0
    %v337 = vadd.f32 0.0, %v336
    %338 = vmatmul.f32.gmra.mxu0 %v114
    %v339 = vpop.f32.mrf.mxu0
    %v340 = vadd.f32 0.0, %v339
    %341 = vmatmul.f32.gmra.mxu0 %v117
    %v342 = vpop.f32.mrf.mxu0
    %v343 = vadd.f32 0.0, %v342
    %344 = vmatmul.f32.gmra.mxu0 %v120
    %v345 = vpop.f32.mrf.mxu0
    %v346 = vadd.f32 0.0, %v345
    %347 = vmatmul.f32.gmra.mxu0 %v123
    %v348 = vpop.f32.mrf.mxu0
    %v349 = vadd.f32 0.0, %v348
    %350 = vmatmul.f32.gmra.mxu0 %v126
    %v351 = vpop.f32.mrf.mxu0
    %v352 = vadd.f32 0.0, %v351
    %353 = vmatmul.f32.gmra.mxu0 %v129
    %v354 = vpop.f32.mrf.mxu0
    %v355 = vadd.f32 0.0, %v354
    %356 = vmatmul.f32.gmra.mxu0 %v132
    %v357 = vpop.f32.mrf.mxu0
    %v358 = vadd.f32 0.0, %v357
    %359 = vmatmul.f32.gmra.mxu0 %v135
    %v360 = vpop.f32.mrf.mxu0
    %v361 = vadd.f32 0.0, %v360
    %362 = vmatmul.f32.gmra.mxu0 %v138
    %v363 = vpop.f32.mrf.mxu0
    %v364 = vadd.f32 0.0, %v363
    %365 = vmatmul.f32.gmra.mxu0 %v141
    %v366 = vpop.f32.mrf.mxu0
    %v367 = vadd.f32 0.0, %v366
    %368 = vmatmul.f32.gmra.mxu0 %v144
    %v369 = vpop.f32.mrf.mxu0
    %v370 = vadd.f32 0.0, %v369
    %371 = vmatmul.f32.gmra.mxu0 %v147
    %v372 = vpop.f32.mrf.mxu0
    %v373 = vadd.f32 0.0, %v372
    %374 = vmatmul.f32.gmra.mxu0 %v150
    %v375 = vpop.f32.mrf.mxu0
    %v376 = vadd.f32 0.0, %v375
    %377 = vmatmul.f32.gmra.mxu0 %v153
    %v378 = vpop.f32.mrf.mxu0
    %v379 = vadd.f32 0.0, %v378
    %380 = vmatmul.f32.gmra.mxu0 %v156
    %v381 = vpop.f32.mrf.mxu0
    %v382 = vadd.f32 0.0, %v381
    %383 = vmatmul.f32.gmra.mxu0 %v159
    %v384 = vpop.f32.mrf.mxu0
    %v385 = vadd.f32 0.0, %v384
    %386 = vmatmul.f32.gmra.mxu0 %v162
    %v387 = vpop.f32.mrf.mxu0
    %v388 = vadd.f32 0.0, %v387
    %389 = vmatmul.f32.gmra.mxu0 %v165
    %v390 = vpop.f32.mrf.mxu0
    %v391 = vadd.f32 0.0, %v390
    %392 = vmatmul.f32.gmra.mxu0 %v168
    %v393 = vpop.f32.mrf.mxu0
    %v394 = vadd.f32 0.0, %v393
    %395 = vmatmul.f32.gmra.mxu0 %v171
    %v396 = vpop.f32.mrf.mxu0
    %v397 = vadd.f32 0.0, %v396
    %398 = vmatmul.f32.gmra.mxu0 %v174
    %v399 = vpop.f32.mrf.mxu0
    %v400 = vadd.f32 0.0, %v399
    %401 = vmatmul.f32.gmra.mxu0 %v177
    %v402 = vpop.f32.mrf.mxu0
    %v403 = vadd.f32 0.0, %v402
    %404 = vmatmul.f32.gmra.mxu0 %v180
    %v405 = vpop.f32.mrf.mxu0
    %v406 = vadd.f32 0.0, %v405
    %407 = vmatmul.f32.gmra.mxu0 %v183
    %v408 = vpop.f32.mrf.mxu0
    %v409 = vadd.f32 0.0, %v408
    %410 = vmatmul.f32.gmra.mxu0 %v186
    %v411 = vpop.f32.mrf.mxu0
    %v412 = vadd.f32 0.0, %v411
    %413 = vmatmul.f32.gmra.mxu0 %v189
    %v414 = vpop.f32.mrf.mxu0
    %v415 = vadd.f32 0.0, %v414
    %416 = vmatmul.f32.gmra.mxu0 %v192
    %v417 = vpop.f32.mrf.mxu0
    %v418 = vadd.f32 0.0, %v417
    %419 = vmatmul.f32.gmra.mxu0 %v195
    %v420 = vpop.f32.mrf.mxu0
    %v421 = vadd.f32 0.0, %v420
    %422 = vmatmul.f32.gmra.mxu0 %v198
    %v423 = vpop.f32.mrf.mxu0
    %v424 = vadd.f32 0.0, %v423
    %425 = vmatmul.f32.gmra.mxu0 %v201
    %v426 = vpop.f32.mrf.mxu0
    %v427 = vadd.f32 0.0, %v426
    %428 = vmatmul.f32.gmra.mxu0 %v204
    %v429 = vpop.f32.mrf.mxu0
    %v430 = vadd.f32 0.0, %v429
    %431 = vdwg.mxu0
    %vm432 = vcmask 64512
    %v434 = vsel %vm432, %v39, 0
    %v437 = vsel %vm432, %v40, 0
    %v440 = vsel %vm432, %v41, 0
    %v443 = vsel %vm432, %v42, 0
    %v446 = vsel %vm432, %v43, 0
    %v449 = vsel %vm432, %v44, 0
    %v452 = vsel %vm432, %v45, 0
    %v455 = vsel %vm432, %v46, 0
    %v458 = vsel %vm432, %v47, 0
    %v461 = vsel %vm432, %v48, 0
    %v464 = vsel %vm432, %v49, 0
    %v467 = vsel %vm432, %v50, 0
    %v470 = vsel %vm432, %v51, 0
    %v473 = vsel %vm432, %v52, 0
    %v476 = vsel %vm432, %v53, 0
    %v479 = vsel %vm432, %v54, 0
    %v482 = vsel %vm432, %v55, 0
    %v485 = vsel %vm432, %v56, 0
    %v488 = vsel %vm432, %v57, 0
    %v491 = vsel %vm432, %v58, 0
    %v494 = vsel %vm432, %v59, 0
    %v497 = vsel %vm432, %v60, 0
    %v500 = vsel %vm432, %v61, 0
    %v503 = vsel %vm432, %v62, 0
    %v506 = vsel %vm432, %v63, 0
    %v509 = vsel %vm432, %v64, 0
    %v512 = vsel %vm432, %v65, 0
    %v515 = vsel %vm432, %v66, 0
    %v518 = vsel %vm432, %v67, 0
    %v521 = vsel %vm432, %v68, 0
    %v524 = vsel %vm432, %v69, 0
    %v527 = vsel %vm432, %v70, 0
    %529 = vmatpush.msra.mxu0 0.0
    %530 = vmatpush.msra.mxu0 0.0
    %531 = vmatpush.msra.mxu0 0.0
    %532 = vmatpush.msra.mxu0 0.0
    %533 = vmatpush.msra.mxu0 0.0
    %534 = vmatpush.msra.mxu0 0.0
    %535 = vmatpush.msra.mxu0 0.0
    %536 = vmatpush.msra.mxu0 0.0
    %537 = vmatpush.msra.mxu0 0.0
    %538 = vmatpush.msra.mxu0 0.0
    %539 = vmatpush.msra.mxu0 0.0
    %540 = vmatpush.msra.mxu0 0.0
    %541 = vmatpush.msra.mxu0 0.0
    %542 = vmatpush.msra.mxu0 0.0
    %543 = vmatpush.msra.mxu0 0.0
    %544 = vmatpush.msra.mxu0 %v71
    %545 = vmatmul.f32.gmra.mxu0 %v434
    %v546 = vpop.f32.mrf.mxu0
    %v547 = vadd.f32 %v224, %v546
    %548 = vmatmul.f32.gmra.mxu0 %v437
    %v549 = vpop.f32.mrf.mxu0
    %v550 = vadd.f32 %v227, %v549
    %551 = vmatmul.f32.gmra.mxu0 %v440
    %v552 = vpop.f32.mrf.mxu0
    %v553 = vadd.f32 %v230, %v552
    %554 = vmatmul.f32.gmra.mxu0 %v443
    %v555 = vpop.f32.mrf.mxu0
    %v556 = vadd.f32 %v233, %v555
    %557 = vmatmul.f32.gmra.mxu0 %v446
    %v558 = vpop.f32.mrf.mxu0
    %v559 = vadd.f32 %v236, %v558
    %560 = vmatmul.f32.gmra.mxu0 %v449
    %v561 = vpop.f32.mrf.mxu0
    %v562 = vadd.f32 %v239, %v561
    %563 = vmatmul.f32.gmra.mxu0 %v452
    %v564 = vpop.f32.mrf.mxu0
    %v565 = vadd.f32 %v242, %v564
    %566 = vmatmul.f32.gmra.mxu0 %v455
    %v567 = vpop.f32.mrf.mxu0
    %v568 = vadd.f32 %v245, %v567
    %569 = vmatmul.f32.gmra.mxu0 %v458
    %v570 = vpop.f32.mrf.mxu0
    %v571 = vadd.f32 %v248, %v570
    %572 = vmatmul.f32.gmra.mxu0 %v461
    %v573 = vpop.f32.mrf.mxu0
    %v574 = vadd.f32 %v251, %v573
    %575 = vmatmul.f32.gmra.mxu0 %v464
    %v576 = vpop.f32.mrf.mxu0
    %v577 = vadd.f32 %v254, %v576
    %578 = vmatmul.f32.gmra.mxu0 %v467
    %v579 = vpop.f32.mrf.mxu0
    %v580 = vadd.f32 %v257, %v579
    %581 = vmatmul.f32.gmra.mxu0 %v470
    %v582 = vpop.f32.mrf.mxu0
    %v583 = vadd.f32 %v260, %v582
    %584 = vmatmul.f32.gmra.mxu0 %v473
    %v585 = vpop.f32.mrf.mxu0
    %v586 = vadd.f32 %v263, %v585
    %587 = vmatmul.f32.gmra.mxu0 %v476
    %v588 = vpop.f32.mrf.mxu0
    %v589 = vadd.f32 %v266, %v588
    %590 = vmatmul.f32.gmra.mxu0 %v479
    %v591 = vpop.f32.mrf.mxu0
    %v592 = vadd.f32 %v269, %v591
    %593 = vmatmul.f32.gmra.mxu0 %v482
    %v594 = vpop.f32.mrf.mxu0
    %v595 = vadd.f32 %v272, %v594
    %596 = vmatmul.f32.gmra.mxu0 %v485
    %v597 = vpop.f32.mrf.mxu0
    %v598 = vadd.f32 %v275, %v597
    %599 = vmatmul.f32.gmra.mxu0 %v488
    %v600 = vpop.f32.mrf.mxu0
    %v601 = vadd.f32 %v278, %v600
    %602 = vmatmul.f32.gmra.mxu0 %v491
    %v603 = vpop.f32.mrf.mxu0
    %v604 = vadd.f32 %v281, %v603
    %605 = vmatmul.f32.gmra.mxu0 %v494
    %v606 = vpop.f32.mrf.mxu0
    %v607 = vadd.f32 %v284, %v606
    %608 = vmatmul.f32.gmra.mxu0 %v497
    %v609 = vpop.f32.mrf.mxu0
    %v610 = vadd.f32 %v287, %v609
    %611 = vmatmul.f32.gmra.mxu0 %v500
    %v612 = vpop.f32.mrf.mxu0
    %v613 = vadd.f32 %v290, %v612
    %614 = vmatmul.f32.gmra.mxu0 %v503
    %v615 = vpop.f32.mrf.mxu0
    %v616 = vadd.f32 %v293, %v615
    %617 = vmatmul.f32.gmra.mxu0 %v506
    %v618 = vpop.f32.mrf.mxu0
    %v619 = vadd.f32 %v296, %v618
    %620 = vmatmul.f32.gmra.mxu0 %v509
    %v621 = vpop.f32.mrf.mxu0
    %v622 = vadd.f32 %v299, %v621
    %623 = vmatmul.f32.gmra.mxu0 %v512
    %v624 = vpop.f32.mrf.mxu0
    %v625 = vadd.f32 %v302, %v624
    %626 = vmatmul.f32.gmra.mxu0 %v515
    %v627 = vpop.f32.mrf.mxu0
    %v628 = vadd.f32 %v305, %v627
    %629 = vmatmul.f32.gmra.mxu0 %v518
    %v630 = vpop.f32.mrf.mxu0
    %v631 = vadd.f32 %v308, %v630
    %632 = vmatmul.f32.gmra.mxu0 %v521
    %v633 = vpop.f32.mrf.mxu0
    %v634 = vadd.f32 %v311, %v633
    %635 = vmatmul.f32.gmra.mxu0 %v524
    %v636 = vpop.f32.mrf.mxu0
    %v637 = vadd.f32 %v314, %v636
    %638 = vmatmul.f32.gmra.mxu0 %v527
    %v639 = vpop.f32.mrf.mxu0
    %v640 = vadd.f32 %v317, %v639
    %641 = vdwg.mxu0
    %642 = vmatpush.msra.mxu0 0.0
    %643 = vmatpush.msra.mxu0 0.0
    %644 = vmatpush.msra.mxu0 0.0
    %645 = vmatpush.msra.mxu0 0.0
    %646 = vmatpush.msra.mxu0 0.0
    %647 = vmatpush.msra.mxu0 0.0
    %648 = vmatpush.msra.mxu0 0.0
    %649 = vmatpush.msra.mxu0 0.0
    %650 = vmatpush.msra.mxu0 0.0
    %651 = vmatpush.msra.mxu0 0.0
    %652 = vmatpush.msra.mxu0 0.0
    %653 = vmatpush.msra.mxu0 0.0
    %654 = vmatpush.msra.mxu0 0.0
    %655 = vmatpush.msra.mxu0 0.0
    %656 = vmatpush.msra.mxu0 0.0
    %657 = vmatpush.msra.mxu0 %v72
    %658 = vmatmul.f32.gmra.mxu0 %v434
    %v659 = vpop.f32.mrf.mxu0
    %v660 = vadd.f32 %v337, %v659
    %661 = vmatmul.f32.gmra.mxu0 %v437
    %v662 = vpop.f32.mrf.mxu0
    %v663 = vadd.f32 %v340, %v662
    %664 = vmatmul.f32.gmra.mxu0 %v440
    %v665 = vpop.f32.mrf.mxu0
    %v666 = vadd.f32 %v343, %v665
    %667 = vmatmul.f32.gmra.mxu0 %v443
    %v668 = vpop.f32.mrf.mxu0
    %v669 = vadd.f32 %v346, %v668
    %670 = vmatmul.f32.gmra.mxu0 %v446
    %v671 = vpop.f32.mrf.mxu0
    %v672 = vadd.f32 %v349, %v671
    %673 = vmatmul.f32.gmra.mxu0 %v449
    %v674 = vpop.f32.mrf.mxu0
    %v675 = vadd.f32 %v352, %v674
    %676 = vmatmul.f32.gmra.mxu0 %v452
    %v677 = vpop.f32.mrf.mxu0
    %v678 = vadd.f32 %v355, %v677
    %679 = vmatmul.f32.gmra.mxu0 %v455
    %v680 = vpop.f32.mrf.mxu0
    %v681 = vadd.f32 %v358, %v680
    %682 = vmatmul.f32.gmra.mxu0 %v458
    %v683 = vpop.f32.mrf.mxu0
    %v684 = vadd.f32 %v361, %v683
    %685 = vmatmul.f32.gmra.mxu0 %v461
    %v686 = vpop.f32.mrf.mxu0
    %v687 = vadd.f32 %v364, %v686
    %688 = vmatmul.f32.gmra.mxu0 %v464
    %v689 = vpop.f32.mrf.mxu0
    %v690 = vadd.f32 %v367, %v689
    %691 = vmatmul.f32.gmra.mxu0 %v467
    %v692 = vpop.f32.mrf.mxu0
    %v693 = vadd.f32 %v370, %v692
    %694 = vmatmul.f32.gmra.mxu0 %v470
    %v695 = vpop.f32.mrf.mxu0
    %v696 = vadd.f32 %v373, %v695
    %697 = vmatmul.f32.gmra.mxu0 %v473
    %v698 = vpop.f32.mrf.mxu0
    %v699 = vadd.f32 %v376, %v698
    %700 = vmatmul.f32.gmra.mxu0 %v476
    %v701 = vpop.f32.mrf.mxu0
    %v702 = vadd.f32 %v379, %v701
    %703 = vmatmul.f32.gmra.mxu0 %v479
    %v704 = vpop.f32.mrf.mxu0
    %v705 = vadd.f32 %v382, %v704
    %706 = vmatmul.f32.gmra.mxu0 %v482
    %v707 = vpop.f32.mrf.mxu0
    %v708 = vadd.f32 %v385, %v707
    %709 = vmatmul.f32.gmra.mxu0 %v485
    %v710 = vpop.f32.mrf.mxu0
    %v711 = vadd.f32 %v388, %v710
    %712 = vmatmul.f32.gmra.mxu0 %v488
    %v713 = vpop.f32.mrf.mxu0
    %v714 = vadd.f32 %v391, %v713
    %715 = vmatmul.f32.gmra.mxu0 %v491
    %v716 = vpop.f32.mrf.mxu0
    %v717 = vadd.f32 %v394, %v716
    %718 = vmatmul.f32.gmra.mxu0 %v494
    %v719 = vpop.f32.mrf.mxu0
    %v720 = vadd.f32 %v397, %v719
    %721 = vmatmul.f32.gmra.mxu0 %v497
    %v722 = vpop.f32.mrf.mxu0
    %v723 = vadd.f32 %v400, %v722
    %724 = vmatmul.f32.gmra.mxu0 %v500
    %v725 = vpop.f32.mrf.mxu0
    %v726 = vadd.f32 %v403, %v725
    %727 = vmatmul.f32.gmra.mxu0 %v503
    %v728 = vpop.f32.mrf.mxu0
    %v729 = vadd.f32 %v406, %v728
    %730 = vmatmul.f32.gmra.mxu0 %v506
    %v731 = vpop.f32.mrf.mxu0
    %v732 = vadd.f32 %v409, %v731
    %733 = vmatmul.f32.gmra.mxu0 %v509
    %v734 = vpop.f32.mrf.mxu0
    %v735 = vadd.f32 %v412, %v734
    %736 = vmatmul.f32.gmra.mxu0 %v512
    %v737 = vpop.f32.mrf.mxu0
    %v738 = vadd.f32 %v415, %v737
    %739 = vmatmul.f32.gmra.mxu0 %v515
    %v740 = vpop.f32.mrf.mxu0
    %v741 = vadd.f32 %v418, %v740
    %742 = vmatmul.f32.gmra.mxu0 %v518
    %v743 = vpop.f32.mrf.mxu0
    %v744 = vadd.f32 %v421, %v743
    %745 = vmatmul.f32.gmra.mxu0 %v521
    %v746 = vpop.f32.mrf.mxu0
    %v747 = vadd.f32 %v424, %v746
    %748 = vmatmul.f32.gmra.mxu0 %v524
    %v749 = vpop.f32.mrf.mxu0
    %v750 = vadd.f32 %v427, %v749
    %751 = vmatmul.f32.gmra.mxu0 %v527
    %v752 = vpop.f32.mrf.mxu0
    %v753 = vadd.f32 %v430, %v752
    %754 = vdwg.mxu0
    %v755 = vld [vmem:[%s2] sm:$0xff]
    %v756 = vld [vmem:[%s2 + $0x8] sm:$0xff]
    %v757 = vld [vmem:[%s2 + $0x10] sm:$0xff]
    %v758 = vld [vmem:[%s2 + $0x18] sm:$0xff]
    %v759 = vld [vmem:[%s2 + $0x20] sm:$0xff]
    %v760 = vld [vmem:[%s2 + $0x28] sm:$0xff]
    %v761 = vld [vmem:[%s2 + $0x30] sm:$0xff]
    %v762 = vld [vmem:[%s2 + $0x38] sm:$0xff]
    %v763 = vld [vmem:[%s2 + $0x40] sm:$0xff]
    %v764 = vld [vmem:[%s2 + $0x48] sm:$0xff]
    %v765 = vld [vmem:[%s2 + $0x50] sm:$0xff]
    %v766 = vld [vmem:[%s2 + $0x58] sm:$0xff]
    %v767 = vld [vmem:[%s2 + $0x60] sm:$0xff]
    %v768 = vld [vmem:[%s2 + $0x68] sm:$0xff]
    %v769 = vld [vmem:[%s2 + $0x70] sm:$0xff]
    %v770 = vld [vmem:[%s2 + $0x78] sm:$0xff]
    %v771 = vld [vmem:[%s2 + $0x80] sm:$0xff]
    %v772 = vld [vmem:[%s2 + $0x88] sm:$0xff]
    %v773 = vld [vmem:[%s2 + $0x90] sm:$0xff]
    %v774 = vld [vmem:[%s2 + $0x98] sm:$0xff]
    %v775 = vld [vmem:[%s2 + $0xa0] sm:$0xff]
    %v776 = vld [vmem:[%s2 + $0xa8] sm:$0xff]
    %v777 = vld [vmem:[%s2 + $0xb0] sm:$0xff]
    %v778 = vld [vmem:[%s2 + $0xb8] sm:$0xff]
    %v779 = vld [vmem:[%s2 + $0xc0] sm:$0xff]
    %v780 = vld [vmem:[%s2 + $0xc8] sm:$0xff]
    %v781 = vld [vmem:[%s2 + $0xd0] sm:$0xff]
    %v782 = vld [vmem:[%s2 + $0xd8] sm:$0xff]
    %v783 = vld [vmem:[%s2 + $0xe0] sm:$0xff]
    %v784 = vld [vmem:[%s2 + $0xe8] sm:$0xff]
    %v785 = vld [vmem:[%s2 + $0xf0] sm:$0xff]
    %v786 = vld [vmem:[%s2 + $0xf8] sm:$0xff]
    %v787 = vld [vmem:[%s5] sm:$0xff]
    %v788 = vld [vmem:[%s5 + $0x8] sm:$0xff]
    %v789 = vld [vmem:[%s5 + $0x10] sm:$0xff]
    %v790 = vld [vmem:[%s5 + $0x18] sm:$0xff]
    %v792 = vsel %vm109, %v755, 0
    %v795 = vsel %vm109, %v756, 0
    %v798 = vsel %vm109, %v757, 0
    %v801 = vsel %vm109, %v758, 0
    %v804 = vsel %vm109, %v759, 0
    %v807 = vsel %vm109, %v760, 0
    %v810 = vsel %vm109, %v761, 0
    %v813 = vsel %vm109, %v762, 0
    %v816 = vsel %vm109, %v763, 0
    %v819 = vsel %vm109, %v764, 0
    %v822 = vsel %vm109, %v765, 0
    %v825 = vsel %vm109, %v766, 0
    %v828 = vsel %vm109, %v767, 0
    %v831 = vsel %vm109, %v768, 0
    %v834 = vsel %vm109, %v769, 0
    %v837 = vsel %vm109, %v770, 0
    %v840 = vsel %vm109, %v771, 0
    %v843 = vsel %vm109, %v772, 0
    %v846 = vsel %vm109, %v773, 0
    %v849 = vsel %vm109, %v774, 0
    %v852 = vsel %vm109, %v775, 0
    %v855 = vsel %vm109, %v776, 0
    %v858 = vsel %vm109, %v777, 0
    %v861 = vsel %vm109, %v778, 0
    %v864 = vsel %vm109, %v779, 0
    %v867 = vsel %vm109, %v780, 0
    %v870 = vsel %vm109, %v781, 0
    %v873 = vsel %vm109, %v782, 0
    %v876 = vsel %vm109, %v783, 0
    %v879 = vsel %vm109, %v784, 0
    %v882 = vsel %vm109, %v785, 0
    %v885 = vsel %vm109, %v786, 0
    %887 = vmatpush.msra.mxu0 0.0
    %888 = vmatpush.msra.mxu0 0.0
    %889 = vmatpush.msra.mxu0 0.0
    %890 = vmatpush.msra.mxu0 0.0
    %891 = vmatpush.msra.mxu0 0.0
    %892 = vmatpush.msra.mxu0 0.0
    %893 = vmatpush.msra.mxu0 0.0
    %894 = vmatpush.msra.mxu0 0.0
    %895 = vmatpush.msra.mxu0 0.0
    %896 = vmatpush.msra.mxu0 0.0
    %897 = vmatpush.msra.mxu0 0.0
    %898 = vmatpush.msra.mxu0 0.0
    %899 = vmatpush.msra.mxu0 0.0
    %900 = vmatpush.msra.mxu0 0.0
    %901 = vmatpush.msra.mxu0 %v789
    %902 = vmatpush.msra.mxu0 %v787
    %903 = vmatmul.f32.gmra.mxu0 %v792
    %v904 = vpop.f32.mrf.mxu0
    %v905 = vadd.f32 0.0, %v904
    %906 = vmatmul.f32.gmra.mxu0 %v795
    %v907 = vpop.f32.mrf.mxu0
    %v908 = vadd.f32 0.0, %v907
    %909 = vmatmul.f32.gmra.mxu0 %v798
    %v910 = vpop.f32.mrf.mxu0
    %v911 = vadd.f32 0.0, %v910
    %912 = vmatmul.f32.gmra.mxu0 %v801
    %v913 = vpop.f32.mrf.mxu0
    %v914 = vadd.f32 0.0, %v913
    %915 = vmatmul.f32.gmra.mxu0 %v804
    %v916 = vpop.f32.mrf.mxu0
    %v917 = vadd.f32 0.0, %v916
    %918 = vmatmul.f32.gmra.mxu0 %v807
    %v919 = vpop.f32.mrf.mxu0
    %v920 = vadd.f32 0.0, %v919
    %921 = vmatmul.f32.gmra.mxu0 %v810
    %v922 = vpop.f32.mrf.mxu0
    %v923 = vadd.f32 0.0, %v922
    %924 = vmatmul.f32.gmra.mxu0 %v813
    %v925 = vpop.f32.mrf.mxu0
    %v926 = vadd.f32 0.0, %v925
    %927 = vmatmul.f32.gmra.mxu0 %v816
    %v928 = vpop.f32.mrf.mxu0
    %v929 = vadd.f32 0.0, %v928
    %930 = vmatmul.f32.gmra.mxu0 %v819
    %v931 = vpop.f32.mrf.mxu0
    %v932 = vadd.f32 0.0, %v931
    %933 = vmatmul.f32.gmra.mxu0 %v822
    %v934 = vpop.f32.mrf.mxu0
    %v935 = vadd.f32 0.0, %v934
    %936 = vmatmul.f32.gmra.mxu0 %v825
    %v937 = vpop.f32.mrf.mxu0
    %v938 = vadd.f32 0.0, %v937
    %939 = vmatmul.f32.gmra.mxu0 %v828
    %v940 = vpop.f32.mrf.mxu0
    %v941 = vadd.f32 0.0, %v940
    %942 = vmatmul.f32.gmra.mxu0 %v831
    %v943 = vpop.f32.mrf.mxu0
    %v944 = vadd.f32 0.0, %v943
    %945 = vmatmul.f32.gmra.mxu0 %v834
    %v946 = vpop.f32.mrf.mxu0
    %v947 = vadd.f32 0.0, %v946
    %948 = vmatmul.f32.gmra.mxu0 %v837
    %v949 = vpop.f32.mrf.mxu0
    %v950 = vadd.f32 0.0, %v949
    %951 = vmatmul.f32.gmra.mxu0 %v840
    %v952 = vpop.f32.mrf.mxu0
    %v953 = vadd.f32 0.0, %v952
    %954 = vmatmul.f32.gmra.mxu0 %v843
    %v955 = vpop.f32.mrf.mxu0
    %v956 = vadd.f32 0.0, %v955
    %957 = vmatmul.f32.gmra.mxu0 %v846
    %v958 = vpop.f32.mrf.mxu0
    %v959 = vadd.f32 0.0, %v958
    %960 = vmatmul.f32.gmra.mxu0 %v849
    %v961 = vpop.f32.mrf.mxu0
    %v962 = vadd.f32 0.0, %v961
    %963 = vmatmul.f32.gmra.mxu0 %v852
    %v964 = vpop.f32.mrf.mxu0
    %v965 = vadd.f32 0.0, %v964
    %966 = vmatmul.f32.gmra.mxu0 %v855
    %v967 = vpop.f32.mrf.mxu0
    %v968 = vadd.f32 0.0, %v967
    %969 = vmatmul.f32.gmra.mxu0 %v858
    %v970 = vpop.f32.mrf.mxu0
    %v971 = vadd.f32 0.0, %v970
    %972 = vmatmul.f32.gmra.mxu0 %v861
    %v973 = vpop.f32.mrf.mxu0
    %v974 = vadd.f32 0.0, %v973
    %975 = vmatmul.f32.gmra.mxu0 %v864
    %v976 = vpop.f32.mrf.mxu0
    %v977 = vadd.f32 0.0, %v976
    %978 = vmatmul.f32.gmra.mxu0 %v867
    %v979 = vpop.f32.mrf.mxu0
    %v980 = vadd.f32 0.0, %v979
    %981 = vmatmul.f32.gmra.mxu0 %v870
    %v982 = vpop.f32.mrf.mxu0
    %v983 = vadd.f32 0.0, %v982
    %984 = vmatmul.f32.gmra.mxu0 %v873
    %v985 = vpop.f32.mrf.mxu0
    %v986 = vadd.f32 0.0, %v985
    %987 = vmatmul.f32.gmra.mxu0 %v876
    %v988 = vpop.f32.mrf.mxu0
    %v989 = vadd.f32 0.0, %v988
    %990 = vmatmul.f32.gmra.mxu0 %v879
    %v991 = vpop.f32.mrf.mxu0
    %v992 = vadd.f32 0.0, %v991
    %993 = vmatmul.f32.gmra.mxu0 %v882
    %v994 = vpop.f32.mrf.mxu0
    %v995 = vadd.f32 0.0, %v994
    %996 = vmatmul.f32.gmra.mxu0 %v885
    %v997 = vpop.f32.mrf.mxu0
    %v998 = vadd.f32 0.0, %v997
    %999 = vdwg.mxu0
    %1000 = vmatpush.msra.mxu0 0.0
    %1001 = vmatpush.msra.mxu0 0.0
    %1002 = vmatpush.msra.mxu0 0.0
    %1003 = vmatpush.msra.mxu0 0.0
    %1004 = vmatpush.msra.mxu0 0.0
    %1005 = vmatpush.msra.mxu0 0.0
    %1006 = vmatpush.msra.mxu0 0.0
    %1007 = vmatpush.msra.mxu0 0.0
    %1008 = vmatpush.msra.mxu0 0.0
    %1009 = vmatpush.msra.mxu0 0.0
    %1010 = vmatpush.msra.mxu0 0.0
    %1011 = vmatpush.msra.mxu0 0.0
    %1012 = vmatpush.msra.mxu0 0.0
    %1013 = vmatpush.msra.mxu0 0.0
    %1014 = vmatpush.msra.mxu0 %v790
    %1015 = vmatpush.msra.mxu0 %v788
    %1016 = vmatmul.f32.gmra.mxu0 %v792
    %v1017 = vpop.f32.mrf.mxu0
    %v1018 = vadd.f32 0.0, %v1017
    %1019 = vmatmul.f32.gmra.mxu0 %v795
    %v1020 = vpop.f32.mrf.mxu0
    %v1021 = vadd.f32 0.0, %v1020
    %1022 = vmatmul.f32.gmra.mxu0 %v798
    %v1023 = vpop.f32.mrf.mxu0
    %v1024 = vadd.f32 0.0, %v1023
    %1025 = vmatmul.f32.gmra.mxu0 %v801
    %v1026 = vpop.f32.mrf.mxu0
    %v1027 = vadd.f32 0.0, %v1026
    %1028 = vmatmul.f32.gmra.mxu0 %v804
    %v1029 = vpop.f32.mrf.mxu0
    %v1030 = vadd.f32 0.0, %v1029
    %1031 = vmatmul.f32.gmra.mxu0 %v807
    %v1032 = vpop.f32.mrf.mxu0
    %v1033 = vadd.f32 0.0, %v1032
    %1034 = vmatmul.f32.gmra.mxu0 %v810
    %v1035 = vpop.f32.mrf.mxu0
    %v1036 = vadd.f32 0.0, %v1035
    %1037 = vmatmul.f32.gmra.mxu0 %v813
    %v1038 = vpop.f32.mrf.mxu0
    %v1039 = vadd.f32 0.0, %v1038
    %1040 = vmatmul.f32.gmra.mxu0 %v816
    %v1041 = vpop.f32.mrf.mxu0
    %v1042 = vadd.f32 0.0, %v1041
    %1043 = vmatmul.f32.gmra.mxu0 %v819
    %v1044 = vpop.f32.mrf.mxu0
    %v1045 = vadd.f32 0.0, %v1044
    %1046 = vmatmul.f32.gmra.mxu0 %v822
    %v1047 = vpop.f32.mrf.mxu0
    %v1048 = vadd.f32 0.0, %v1047
    %1049 = vmatmul.f32.gmra.mxu0 %v825
    %v1050 = vpop.f32.mrf.mxu0
    %v1051 = vadd.f32 0.0, %v1050
    %1052 = vmatmul.f32.gmra.mxu0 %v828
    %v1053 = vpop.f32.mrf.mxu0
    %v1054 = vadd.f32 0.0, %v1053
    %1055 = vmatmul.f32.gmra.mxu0 %v831
    %v1056 = vpop.f32.mrf.mxu0
    %v1057 = vadd.f32 0.0, %v1056
    %1058 = vmatmul.f32.gmra.mxu0 %v834
    %v1059 = vpop.f32.mrf.mxu0
    %v1060 = vadd.f32 0.0, %v1059
    %1061 = vmatmul.f32.gmra.mxu0 %v837
    %v1062 = vpop.f32.mrf.mxu0
    %v1063 = vadd.f32 0.0, %v1062
    %1064 = vmatmul.f32.gmra.mxu0 %v840
    %v1065 = vpop.f32.mrf.mxu0
    %v1066 = vadd.f32 0.0, %v1065
    %1067 = vmatmul.f32.gmra.mxu0 %v843
    %v1068 = vpop.f32.mrf.mxu0
    %v1069 = vadd.f32 0.0, %v1068
    %1070 = vmatmul.f32.gmra.mxu0 %v846
    %v1071 = vpop.f32.mrf.mxu0
    %v1072 = vadd.f32 0.0, %v1071
    %1073 = vmatmul.f32.gmra.mxu0 %v849
    %v1074 = vpop.f32.mrf.mxu0
    %v1075 = vadd.f32 0.0, %v1074
    %1076 = vmatmul.f32.gmra.mxu0 %v852
    %v1077 = vpop.f32.mrf.mxu0
    %v1078 = vadd.f32 0.0, %v1077
    %1079 = vmatmul.f32.gmra.mxu0 %v855
    %v1080 = vpop.f32.mrf.mxu0
    %v1081 = vadd.f32 0.0, %v1080
    %1082 = vmatmul.f32.gmra.mxu0 %v858
    %v1083 = vpop.f32.mrf.mxu0
    %v1084 = vadd.f32 0.0, %v1083
    %1085 = vmatmul.f32.gmra.mxu0 %v861
    %v1086 = vpop.f32.mrf.mxu0
    %v1087 = vadd.f32 0.0, %v1086
    %1088 = vmatmul.f32.gmra.mxu0 %v864
    %v1089 = vpop.f32.mrf.mxu0
    %v1090 = vadd.f32 0.0, %v1089
    %1091 = vmatmul.f32.gmra.mxu0 %v867
    %v1092 = vpop.f32.mrf.mxu0
    %v1093 = vadd.f32 0.0, %v1092
    %1094 = vmatmul.f32.gmra.mxu0 %v870
    %v1095 = vpop.f32.mrf.mxu0
    %v1096 = vadd.f32 0.0, %v1095
    %1097 = vmatmul.f32.gmra.mxu0 %v873
    %v1098 = vpop.f32.mrf.mxu0
    %v1099 = vadd.f32 0.0, %v1098
    %1100 = vmatmul.f32.gmra.mxu0 %v876
    %v1101 = vpop.f32.mrf.mxu0
    %v1102 = vadd.f32 0.0, %v1101
    %1103 = vmatmul.f32.gmra.mxu0 %v879
    %v1104 = vpop.f32.mrf.mxu0
    %v1105 = vadd.f32 0.0, %v1104
    %1106 = vmatmul.f32.gmra.mxu0 %v882
    %v1107 = vpop.f32.mrf.mxu0
    %v1108 = vadd.f32 0.0, %v1107
    %1109 = vmatmul.f32.gmra.mxu0 %v885
    %v1110 = vpop.f32.mrf.mxu0
    %v1111 = vadd.f32 0.0, %v1110
    %1112 = vdwg.mxu0
    %v1113 = vadd.f32 %v547, %v905
    %v1114 = vadd.f32 %v660, %v1018
    %v1115 = vadd.f32 %v550, %v908
    %v1116 = vadd.f32 %v663, %v1021
    %v1117 = vadd.f32 %v553, %v911
    %v1118 = vadd.f32 %v666, %v1024
    %v1119 = vadd.f32 %v556, %v914
    %v1120 = vadd.f32 %v669, %v1027
    %v1121 = vadd.f32 %v559, %v917
    %v1122 = vadd.f32 %v672, %v1030
    %v1123 = vadd.f32 %v562, %v920
    %v1124 = vadd.f32 %v675, %v1033
    %v1125 = vadd.f32 %v565, %v923
    %v1126 = vadd.f32 %v678, %v1036
    %v1127 = vadd.f32 %v568, %v926
    %v1128 = vadd.f32 %v681, %v1039
    %v1129 = vadd.f32 %v571, %v929
    %v1130 = vadd.f32 %v684, %v1042
    %v1131 = vadd.f32 %v574, %v932
    %v1132 = vadd.f32 %v687, %v1045
    %v1133 = vadd.f32 %v577, %v935
    %v1134 = vadd.f32 %v690, %v1048
    %v1135 = vadd.f32 %v580, %v938
    %v1136 = vadd.f32 %v693, %v1051
    %v1137 = vadd.f32 %v583, %v941
    %v1138 = vadd.f32 %v696, %v1054
    %v1139 = vadd.f32 %v586, %v944
    %v1140 = vadd.f32 %v699, %v1057
    %v1141 = vadd.f32 %v589, %v947
    %v1142 = vadd.f32 %v702, %v1060
    %v1143 = vadd.f32 %v592, %v950
    %v1144 = vadd.f32 %v705, %v1063
    %v1145 = vadd.f32 %v595, %v953
    %v1146 = vadd.f32 %v708, %v1066
    %v1147 = vadd.f32 %v598, %v956
    %v1148 = vadd.f32 %v711, %v1069
    %v1149 = vadd.f32 %v601, %v959
    %v1150 = vadd.f32 %v714, %v1072
    %v1151 = vadd.f32 %v604, %v962
    %v1152 = vadd.f32 %v717, %v1075
    %v1153 = vadd.f32 %v607, %v965
    %v1154 = vadd.f32 %v720, %v1078
    %v1155 = vadd.f32 %v610, %v968
    %v1156 = vadd.f32 %v723, %v1081
    %v1157 = vadd.f32 %v613, %v971
    %v1158 = vadd.f32 %v726, %v1084
    %v1159 = vadd.f32 %v616, %v974
    %v1160 = vadd.f32 %v729, %v1087
    %v1161 = vadd.f32 %v619, %v977
    %v1162 = vadd.f32 %v732, %v1090
    %v1163 = vadd.f32 %v622, %v980
    %v1164 = vadd.f32 %v735, %v1093
    %v1165 = vadd.f32 %v625, %v983
    %v1166 = vadd.f32 %v738, %v1096
    %v1167 = vadd.f32 %v628, %v986
    %v1168 = vadd.f32 %v741, %v1099
    %v1169 = vadd.f32 %v631, %v989
    %v1170 = vadd.f32 %v744, %v1102
    %v1171 = vadd.f32 %v634, %v992
    %v1172 = vadd.f32 %v747, %v1105
    %v1173 = vadd.f32 %v637, %v995
    %v1174 = vadd.f32 %v750, %v1108
    %v1175 = vadd.f32 %v640, %v998
    %v1176 = vadd.f32 %v753, %v1111
    %v1177 = vld [vmem:[%s6] sm:$0x3]
    %v1179 = vperm.slane %v1177, 0
    %v1180 = vperm.slane %v1177, 1
    %v1183 = vadd.f32 %v1113, %v1179
    %v1184 = vadd.f32 %v1114, %v1180
    %v1185 = vadd.f32 %v1115, %v1179
    %v1186 = vadd.f32 %v1116, %v1180
    %v1187 = vadd.f32 %v1117, %v1179
    %v1188 = vadd.f32 %v1118, %v1180
    %v1189 = vadd.f32 %v1119, %v1179
    %v1190 = vadd.f32 %v1120, %v1180
    %v1191 = vadd.f32 %v1121, %v1179
    %v1192 = vadd.f32 %v1122, %v1180
    %v1193 = vadd.f32 %v1123, %v1179
    %v1194 = vadd.f32 %v1124, %v1180
    %v1195 = vadd.f32 %v1125, %v1179
    %v1196 = vadd.f32 %v1126, %v1180
    %v1197 = vadd.f32 %v1127, %v1179
    %v1198 = vadd.f32 %v1128, %v1180
    %v1199 = vadd.f32 %v1129, %v1179
    %v1200 = vadd.f32 %v1130, %v1180
    %v1201 = vadd.f32 %v1131, %v1179
    %v1202 = vadd.f32 %v1132, %v1180
    %v1203 = vadd.f32 %v1133, %v1179
    %v1204 = vadd.f32 %v1134, %v1180
    %v1205 = vadd.f32 %v1135, %v1179
    %v1206 = vadd.f32 %v1136, %v1180
    %v1207 = vadd.f32 %v1137, %v1179
    %v1208 = vadd.f32 %v1138, %v1180
    %v1209 = vadd.f32 %v1139, %v1179
    %v1210 = vadd.f32 %v1140, %v1180
    %v1211 = vadd.f32 %v1141, %v1179
    %v1212 = vadd.f32 %v1142, %v1180
    %v1213 = vadd.f32 %v1143, %v1179
    %v1214 = vadd.f32 %v1144, %v1180
    %v1215 = vadd.f32 %v1145, %v1179
    %v1216 = vadd.f32 %v1146, %v1180
    %v1217 = vadd.f32 %v1147, %v1179
    %v1218 = vadd.f32 %v1148, %v1180
    %v1219 = vadd.f32 %v1149, %v1179
    %v1220 = vadd.f32 %v1150, %v1180
    %v1221 = vadd.f32 %v1151, %v1179
    %v1222 = vadd.f32 %v1152, %v1180
    %v1223 = vadd.f32 %v1153, %v1179
    %v1224 = vadd.f32 %v1154, %v1180
    %v1225 = vadd.f32 %v1155, %v1179
    %v1226 = vadd.f32 %v1156, %v1180
    %v1227 = vadd.f32 %v1157, %v1179
    %v1228 = vadd.f32 %v1158, %v1180
    %v1229 = vadd.f32 %v1159, %v1179
    %v1230 = vadd.f32 %v1160, %v1180
    %v1231 = vadd.f32 %v1161, %v1179
    %v1232 = vadd.f32 %v1162, %v1180
    %v1233 = vadd.f32 %v1163, %v1179
    %v1234 = vadd.f32 %v1164, %v1180
    %v1235 = vadd.f32 %v1165, %v1179
    %v1236 = vadd.f32 %v1166, %v1180
    %v1237 = vadd.f32 %v1167, %v1179
    %v1238 = vadd.f32 %v1168, %v1180
    %v1239 = vadd.f32 %v1169, %v1179
    %v1240 = vadd.f32 %v1170, %v1180
    %v1241 = vadd.f32 %v1171, %v1179
    %v1242 = vadd.f32 %v1172, %v1180
    %v1243 = vadd.f32 %v1173, %v1179
    %v1244 = vadd.f32 %v1174, %v1180
    %v1245 = vadd.f32 %v1175, %v1179
    %v1246 = vadd.f32 %v1176, %v1180
    %v1247 = vmax.f32 %v1183, 0.0
    %v1248 = vmax.f32 %v1184, 0.0
    %v1249 = vmax.f32 %v1185, 0.0
    %v1250 = vmax.f32 %v1186, 0.0
    %v1251 = vmax.f32 %v1187, 0.0
    %v1252 = vmax.f32 %v1188, 0.0
    %v1253 = vmax.f32 %v1189, 0.0
    %v1254 = vmax.f32 %v1190, 0.0
    %v1255 = vmax.f32 %v1191, 0.0
    %v1256 = vmax.f32 %v1192, 0.0
    %v1257 = vmax.f32 %v1193, 0.0
    %v1258 = vmax.f32 %v1194, 0.0
    %v1259 = vmax.f32 %v1195, 0.0
    %v1260 = vmax.f32 %v1196, 0.0
    %v1261 = vmax.f32 %v1197, 0.0
    %v1262 = vmax.f32 %v1198, 0.0
    %v1263 = vmax.f32 %v1199, 0.0
    %v1264 = vmax.f32 %v1200, 0.0
    %v1265 = vmax.f32 %v1201, 0.0
    %v1266 = vmax.f32 %v1202, 0.0
    %v1267 = vmax.f32 %v1203, 0.0
    %v1268 = vmax.f32 %v1204, 0.0
    %v1269 = vmax.f32 %v1205, 0.0
    %v1270 = vmax.f32 %v1206, 0.0
    %v1271 = vmax.f32 %v1207, 0.0
    %v1272 = vmax.f32 %v1208, 0.0
    %v1273 = vmax.f32 %v1209, 0.0
    %v1274 = vmax.f32 %v1210, 0.0
    %v1275 = vmax.f32 %v1211, 0.0
    %v1276 = vmax.f32 %v1212, 0.0
    %v1277 = vmax.f32 %v1213, 0.0
    %v1278 = vmax.f32 %v1214, 0.0
    %v1279 = vmax.f32 %v1215, 0.0
    %v1280 = vmax.f32 %v1216, 0.0
    %v1281 = vmax.f32 %v1217, 0.0
    %v1282 = vmax.f32 %v1218, 0.0
    %v1283 = vmax.f32 %v1219, 0.0
    %v1284 = vmax.f32 %v1220, 0.0
    %v1285 = vmax.f32 %v1221, 0.0
    %v1286 = vmax.f32 %v1222, 0.0
    %v1287 = vmax.f32 %v1223, 0.0
    %v1288 = vmax.f32 %v1224, 0.0
    %v1289 = vmax.f32 %v1225, 0.0
    %v1290 = vmax.f32 %v1226, 0.0
    %v1291 = vmax.f32 %v1227, 0.0
    %v1292 = vmax.f32 %v1228, 0.0
    %v1293 = vmax.f32 %v1229, 0.0
    %v1294 = vmax.f32 %v1230, 0.0
    %v1295 = vmax.f32 %v1231, 0.0
    %v1296 = vmax.f32 %v1232, 0.0
    %v1297 = vmax.f32 %v1233, 0.0
    %v1298 = vmax.f32 %v1234, 0.0
    %v1299 = vmax.f32 %v1235, 0.0
    %v1300 = vmax.f32 %v1236, 0.0
    %v1301 = vmax.f32 %v1237, 0.0
    %v1302 = vmax.f32 %v1238, 0.0
    %v1303 = vmax.f32 %v1239, 0.0
    %v1304 = vmax.f32 %v1240, 0.0
    %v1305 = vmax.f32 %v1241, 0.0
    %v1306 = vmax.f32 %v1242, 0.0
    %v1307 = vmax.f32 %v1243, 0.0
    %v1308 = vmax.f32 %v1244, 0.0
    %v1309 = vmax.f32 %v1245, 0.0
    %v1310 = vmax.f32 %v1246, 0.0
    %v1311 = vld [vmem:[%s7] sm:$0xff]
    %v1312 = vld [vmem:[%s7 + $0x8] sm:$0xff]
    %v1313 = vld [vmem:[%s7 + $0x10] sm:$0xff]
    %v1314 = vld [vmem:[%s7 + $0x18] sm:$0xff]
    %v1315 = vld [vmem:[%s7 + $0x20] sm:$0xff]
    %v1316 = vld [vmem:[%s7 + $0x28] sm:$0xff]
    %v1317 = vld [vmem:[%s7 + $0x30] sm:$0xff]
    %v1318 = vld [vmem:[%s7 + $0x38] sm:$0xff]
    %v1319 = vld [vmem:[%s7 + $0x40] sm:$0xff]
    %v1320 = vld [vmem:[%s7 + $0x48] sm:$0xff]
    %v1321 = vld [vmem:[%s7 + $0x50] sm:$0xff]
    %v1322 = vld [vmem:[%s7 + $0x58] sm:$0xff]
    %v1323 = vld [vmem:[%s7 + $0x60] sm:$0xff]
    %v1324 = vld [vmem:[%s7 + $0x68] sm:$0xff]
    %v1325 = vld [vmem:[%s7 + $0x70] sm:$0xff]
    %v1326 = vld [vmem:[%s7 + $0x78] sm:$0xff]
    %v1327 = vld [vmem:[%s7 + $0x80] sm:$0xff]
    %v1328 = vld [vmem:[%s7 + $0x88] sm:$0xff]
    %v1329 = vld [vmem:[%s7 + $0x90] sm:$0xff]
    %v1330 = vld [vmem:[%s7 + $0x98] sm:$0xff]
    %v1331 = vld [vmem:[%s7 + $0xa0] sm:$0xff]
    %v1332 = vld [vmem:[%s7 + $0xa8] sm:$0xff]
    %v1333 = vld [vmem:[%s7 + $0xb0] sm:$0xff]
    %v1334 = vld [vmem:[%s7 + $0xb8] sm:$0xff]
    %v1335 = vld [vmem:[%s7 + $0xc0] sm:$0xff]
    %v1336 = vld [vmem:[%s7 + $0xc8] sm:$0xff]
    %v1337 = vld [vmem:[%s7 + $0xd0] sm:$0xff]
    %v1338 = vld [vmem:[%s7 + $0xd8] sm:$0xff]
    %v1339 = vld [vmem:[%s7 + $0xe0] sm:$0xff]
    %v1340 = vld [vmem:[%s7 + $0xe8] sm:$0xff]
    %v1341 = vld [vmem:[%s7 + $0xf0] sm:$0xff]
    %v1342 = vld [vmem:[%s7 + $0xf8] sm:$0xff]
    %v1343 = vld [vmem:[%s7 + $0x100] sm:$0xff]
    %v1344 = vld [vmem:[%s7 + $0x108] sm:$0xff]
    %v1345 = vld [vmem:[%s7 + $0x110] sm:$0xff]
    %v1346 = vld [vmem:[%s7 + $0x118] sm:$0xff]
    %v1347 = vld [vmem:[%s7 + $0x120] sm:$0xff]
    %v1348 = vld [vmem:[%s7 + $0x128] sm:$0xff]
    %v1349 = vld [vmem:[%s7 + $0x130] sm:$0xff]
    %v1350 = vld [vmem:[%s7 + $0x138] sm:$0xff]
    %v1351 = vld [vmem:[%s7 + $0x140] sm:$0xff]
    %v1352 = vld [vmem:[%s7 + $0x148] sm:$0xff]
    %v1353 = vld [vmem:[%s7 + $0x150] sm:$0xff]
    %v1354 = vld [vmem:[%s7 + $0x158] sm:$0xff]
    %v1355 = vld [vmem:[%s7 + $0x160] sm:$0xff]
    %v1356 = vld [vmem:[%s7 + $0x168] sm:$0xff]
    %v1357 = vld [vmem:[%s7 + $0x170] sm:$0xff]
    %v1358 = vld [vmem:[%s7 + $0x178] sm:$0xff]
    %v1359 = vld [vmem:[%s8] sm:$0x3]
    %v1361 = vperm.slane %v1359, 0
    %v1362 = vperm.slane %v1359, 1
    %vm1365 = vcmask 523264
    %v1367 = vsel %vm1365, %v1248, 0
    %v1370 = vsel %vm1365, %v1250, 0
    %v1373 = vsel %vm1365, %v1252, 0
    %v1376 = vsel %vm1365, %v1254, 0
    %v1379 = vsel %vm1365, %v1256, 0
    %v1382 = vsel %vm1365, %v1258, 0
    %v1385 = vsel %vm1365, %v1260, 0
    %v1388 = vsel %vm1365, %v1262, 0
    %v1391 = vsel %vm1365, %v1264, 0
    %v1394 = vsel %vm1365, %v1266, 0
    %v1397 = vsel %vm1365, %v1268, 0
    %v1400 = vsel %vm1365, %v1270, 0
    %v1403 = vsel %vm1365, %v1272, 0
    %v1406 = vsel %vm1365, %v1274, 0
    %v1409 = vsel %vm1365, %v1276, 0
    %v1412 = vsel %vm1365, %v1278, 0
    %v1415 = vsel %vm1365, %v1280, 0
    %v1418 = vsel %vm1365, %v1282, 0
    %v1421 = vsel %vm1365, %v1284, 0
    %v1424 = vsel %vm1365, %v1286, 0
    %v1427 = vsel %vm1365, %v1288, 0
    %v1430 = vsel %vm1365, %v1290, 0
    %v1433 = vsel %vm1365, %v1292, 0
    %v1436 = vsel %vm1365, %v1294, 0
    %v1439 = vsel %vm1365, %v1296, 0
    %v1442 = vsel %vm1365, %v1298, 0
    %v1445 = vsel %vm1365, %v1300, 0
    %v1448 = vsel %vm1365, %v1302, 0
    %v1451 = vsel %vm1365, %v1304, 0
    %v1454 = vsel %vm1365, %v1306, 0
    %v1457 = vsel %vm1365, %v1308, 0
    %v1460 = vsel %vm1365, %v1310, 0
    %1462 = vmatpush.msra.mxu0 %v1341
    %1463 = vmatpush.msra.mxu0 %v1339
    %1464 = vmatpush.msra.mxu0 %v1337
    %1465 = vmatpush.msra.mxu0 %v1335
    %1466 = vmatpush.msra.mxu0 %v1333
    %1467 = vmatpush.msra.mxu0 %v1331
    %1468 = vmatpush.msra.mxu0 %v1329
    %1469 = vmatpush.msra.mxu0 %v1327
    %1470 = vmatpush.msra.mxu0 %v1325
    %1471 = vmatpush.msra.mxu0 %v1323
    %1472 = vmatpush.msra.mxu0 %v1321
    %1473 = vmatpush.msra.mxu0 %v1319
    %1474 = vmatpush.msra.mxu0 %v1317
    %1475 = vmatpush.msra.mxu0 %v1315
    %1476 = vmatpush.msra.mxu0 %v1313
    %1477 = vmatpush.msra.mxu0 %v1311
    %1478 = vmatmul.f32.gmra.mxu0 %v1247
    %v1479 = vpop.f32.mrf.mxu0
    %v1480 = vadd.f32 %v1361, %v1479
    %1481 = vmatmul.f32.gmra.mxu0 %v1249
    %v1482 = vpop.f32.mrf.mxu0
    %v1483 = vadd.f32 %v1361, %v1482
    %1484 = vmatmul.f32.gmra.mxu0 %v1251
    %v1485 = vpop.f32.mrf.mxu0
    %v1486 = vadd.f32 %v1361, %v1485
    %1487 = vmatmul.f32.gmra.mxu0 %v1253
    %v1488 = vpop.f32.mrf.mxu0
    %v1489 = vadd.f32 %v1361, %v1488
    %1490 = vmatmul.f32.gmra.mxu0 %v1255
    %v1491 = vpop.f32.mrf.mxu0
    %v1492 = vadd.f32 %v1361, %v1491
    %1493 = vmatmul.f32.gmra.mxu0 %v1257
    %v1494 = vpop.f32.mrf.mxu0
    %v1495 = vadd.f32 %v1361, %v1494
    %1496 = vmatmul.f32.gmra.mxu0 %v1259
    %v1497 = vpop.f32.mrf.mxu0
    %v1498 = vadd.f32 %v1361, %v1497
    %1499 = vmatmul.f32.gmra.mxu0 %v1261
    %v1500 = vpop.f32.mrf.mxu0
    %v1501 = vadd.f32 %v1361, %v1500
    %1502 = vmatmul.f32.gmra.mxu0 %v1263
    %v1503 = vpop.f32.mrf.mxu0
    %v1504 = vadd.f32 %v1361, %v1503
    %1505 = vmatmul.f32.gmra.mxu0 %v1265
    %v1506 = vpop.f32.mrf.mxu0
    %v1507 = vadd.f32 %v1361, %v1506
    %1508 = vmatmul.f32.gmra.mxu0 %v1267
    %v1509 = vpop.f32.mrf.mxu0
    %v1510 = vadd.f32 %v1361, %v1509
    %1511 = vmatmul.f32.gmra.mxu0 %v1269
    %v1512 = vpop.f32.mrf.mxu0
    %v1513 = vadd.f32 %v1361, %v1512
    %1514 = vmatmul.f32.gmra.mxu0 %v1271
    %v1515 = vpop.f32.mrf.mxu0
    %v1516 = vadd.f32 %v1361, %v1515
    %1517 = vmatmul.f32.gmra.mxu0 %v1273
    %v1518 = vpop.f32.mrf.mxu0
    %v1519 = vadd.f32 %v1361, %v1518
    %1520 = vmatmul.f32.gmra.mxu0 %v1275
    %v1521 = vpop.f32.mrf.mxu0
    %v1522 = vadd.f32 %v1361, %v1521
    %1523 = vmatmul.f32.gmra.mxu0 %v1277
    %v1524 = vpop.f32.mrf.mxu0
    %v1525 = vadd.f32 %v1361, %v1524
    %1526 = vmatmul.f32.gmra.mxu0 %v1279
    %v1527 = vpop.f32.mrf.mxu0
    %v1528 = vadd.f32 %v1361, %v1527
    %1529 = vmatmul.f32.gmra.mxu0 %v1281
    %v1530 = vpop.f32.mrf.mxu0
    %v1531 = vadd.f32 %v1361, %v1530
    %1532 = vmatmul.f32.gmra.mxu0 %v1283
    %v1533 = vpop.f32.mrf.mxu0
    %v1534 = vadd.f32 %v1361, %v1533
    %1535 = vmatmul.f32.gmra.mxu0 %v1285
    %v1536 = vpop.f32.mrf.mxu0
    %v1537 = vadd.f32 %v1361, %v1536
    %1538 = vmatmul.f32.gmra.mxu0 %v1287
    %v1539 = vpop.f32.mrf.mxu0
    %v1540 = vadd.f32 %v1361, %v1539
    %1541 = vmatmul.f32.gmra.mxu0 %v1289
    %v1542 = vpop.f32.mrf.mxu0
    %v1543 = vadd.f32 %v1361, %v1542
    %1544 = vmatmul.f32.gmra.mxu0 %v1291
    %v1545 = vpop.f32.mrf.mxu0
    %v1546 = vadd.f32 %v1361, %v1545
    %1547 = vmatmul.f32.gmra.mxu0 %v1293
    %v1548 = vpop.f32.mrf.mxu0
    %v1549 = vadd.f32 %v1361, %v1548
    %1550 = vmatmul.f32.gmra.mxu0 %v1295
    %v1551 = vpop.f32.mrf.mxu0
    %v1552 = vadd.f32 %v1361, %v1551
    %1553 = vmatmul.f32.gmra.mxu0 %v1297
    %v1554 = vpop.f32.mrf.mxu0
    %v1555 = vadd.f32 %v1361, %v1554
    %1556 = vmatmul.f32.gmra.mxu0 %v1299
    %v1557 = vpop.f32.mrf.mxu0
    %v1558 = vadd.f32 %v1361, %v1557
    %1559 = vmatmul.f32.gmra.mxu0 %v1301
    %v1560 = vpop.f32.mrf.mxu0
    %v1561 = vadd.f32 %v1361, %v1560
    %1562 = vmatmul.f32.gmra.mxu0 %v1303
    %v1563 = vpop.f32.mrf.mxu0
    %v1564 = vadd.f32 %v1361, %v1563
    %1565 = vmatmul.f32.gmra.mxu0 %v1305
    %v1566 = vpop.f32.mrf.mxu0
    %v1567 = vadd.f32 %v1361, %v1566
    %1568 = vmatmul.f32.gmra.mxu0 %v1307
    %v1569 = vpop.f32.mrf.mxu0
    %v1570 = vadd.f32 %v1361, %v1569
    %1571 = vmatmul.f32.gmra.mxu0 %v1309
    %v1572 = vpop.f32.mrf.mxu0
    %v1573 = vadd.f32 %v1361, %v1572
    %1574 = vdwg.mxu0
    %1575 = vmatpush.msra.mxu0 0.0
    %1576 = vmatpush.msra.mxu0 0.0
    %1577 = vmatpush.msra.mxu0 0.0
    %1578 = vmatpush.msra.mxu0 0.0
    %1579 = vmatpush.msra.mxu0 0.0
    %1580 = vmatpush.msra.mxu0 0.0
    %1581 = vmatpush.msra.mxu0 0.0
    %1582 = vmatpush.msra.mxu0 0.0
    %1583 = vmatpush.msra.mxu0 %v1357
    %1584 = vmatpush.msra.mxu0 %v1355
    %1585 = vmatpush.msra.mxu0 %v1353
    %1586 = vmatpush.msra.mxu0 %v1351
    %1587 = vmatpush.msra.mxu0 %v1349
    %1588 = vmatpush.msra.mxu0 %v1347
    %1589 = vmatpush.msra.mxu0 %v1345
    %1590 = vmatpush.msra.mxu0 %v1343
    %1591 = vmatmul.f32.gmra.mxu0 %v1367
    %v1592 = vpop.f32.mrf.mxu0
    %v1593 = vadd.f32 %v1480, %v1592
    %1594 = vmatmul.f32.gmra.mxu0 %v1370
    %v1595 = vpop.f32.mrf.mxu0
    %v1596 = vadd.f32 %v1483, %v1595
    %1597 = vmatmul.f32.gmra.mxu0 %v1373
    %v1598 = vpop.f32.mrf.mxu0
    %v1599 = vadd.f32 %v1486, %v1598
    %1600 = vmatmul.f32.gmra.mxu0 %v1376
    %v1601 = vpop.f32.mrf.mxu0
    %v1602 = vadd.f32 %v1489, %v1601
    %1603 = vmatmul.f32.gmra.mxu0 %v1379
    %v1604 = vpop.f32.mrf.mxu0
    %v1605 = vadd.f32 %v1492, %v1604
    %1606 = vmatmul.f32.gmra.mxu0 %v1382
    %v1607 = vpop.f32.mrf.mxu0
    %v1608 = vadd.f32 %v1495, %v1607
    %1609 = vmatmul.f32.gmra.mxu0 %v1385
    %v1610 = vpop.f32.mrf.mxu0
    %v1611 = vadd.f32 %v1498, %v1610
    %1612 = vmatmul.f32.gmra.mxu0 %v1388
    %v1613 = vpop.f32.mrf.mxu0
    %v1614 = vadd.f32 %v1501, %v1613
    %1615 = vmatmul.f32.gmra.mxu0 %v1391
    %v1616 = vpop.f32.mrf.mxu0
    %v1617 = vadd.f32 %v1504, %v1616
    %1618 = vmatmul.f32.gmra.mxu0 %v1394
    %v1619 = vpop.f32.mrf.mxu0
    %v1620 = vadd.f32 %v1507, %v1619
    %1621 = vmatmul.f32.gmra.mxu0 %v1397
    %v1622 = vpop.f32.mrf.mxu0
    %v1623 = vadd.f32 %v1510, %v1622
    %1624 = vmatmul.f32.gmra.mxu0 %v1400
    %v1625 = vpop.f32.mrf.mxu0
    %v1626 = vadd.f32 %v1513, %v1625
    %1627 = vmatmul.f32.gmra.mxu0 %v1403
    %v1628 = vpop.f32.mrf.mxu0
    %v1629 = vadd.f32 %v1516, %v1628
    %1630 = vmatmul.f32.gmra.mxu0 %v1406
    %v1631 = vpop.f32.mrf.mxu0
    %v1632 = vadd.f32 %v1519, %v1631
    %1633 = vmatmul.f32.gmra.mxu0 %v1409
    %v1634 = vpop.f32.mrf.mxu0
    %v1635 = vadd.f32 %v1522, %v1634
    %1636 = vmatmul.f32.gmra.mxu0 %v1412
    %v1637 = vpop.f32.mrf.mxu0
    %v1638 = vadd.f32 %v1525, %v1637
    %1639 = vmatmul.f32.gmra.mxu0 %v1415
    %v1640 = vpop.f32.mrf.mxu0
    %v1641 = vadd.f32 %v1528, %v1640
    %1642 = vmatmul.f32.gmra.mxu0 %v1418
    %v1643 = vpop.f32.mrf.mxu0
    %v1644 = vadd.f32 %v1531, %v1643
    %1645 = vmatmul.f32.gmra.mxu0 %v1421
    %v1646 = vpop.f32.mrf.mxu0
    %v1647 = vadd.f32 %v1534, %v1646
    %1648 = vmatmul.f32.gmra.mxu0 %v1424
    %v1649 = vpop.f32.mrf.mxu0
    %v1650 = vadd.f32 %v1537, %v1649
    %1651 = vmatmul.f32.gmra.mxu0 %v1427
    %v1652 = vpop.f32.mrf.mxu0
    %v1653 = vadd.f32 %v1540, %v1652
    %1654 = vmatmul.f32.gmra.mxu0 %v1430
    %v1655 = vpop.f32.mrf.mxu0
    %v1656 = vadd.f32 %v1543, %v1655
    %1657 = vmatmul.f32.gmra.mxu0 %v1433
    %v1658 = vpop.f32.mrf.mxu0
    %v1659 = vadd.f32 %v1546, %v1658
    %1660 = vmatmul.f32.gmra.mxu0 %v1436
    %v1661 = vpop.f32.mrf.mxu0
    %v1662 = vadd.f32 %v1549, %v1661
    %1663 = vmatmul.f32.gmra.mxu0 %v1439
    %v1664 = vpop.f32.mrf.mxu0
    %v1665 = vadd.f32 %v1552, %v1664
    %1666 = vmatmul.f32.gmra.mxu0 %v1442
    %v1667 = vpop.f32.mrf.mxu0
    %v1668 = vadd.f32 %v1555, %v1667
    %1669 = vmatmul.f32.gmra.mxu0 %v1445
    %v1670 = vpop.f32.mrf.mxu0
    %v1671 = vadd.f32 %v1558, %v1670
    %1672 = vmatmul.f32.gmra.mxu0 %v1448
    %v1673 = vpop.f32.mrf.mxu0
    %v1674 = vadd.f32 %v1561, %v1673
    %1675 = vmatmul.f32.gmra.mxu0 %v1451
    %v1676 = vpop.f32.mrf.mxu0
    %v1677 = vadd.f32 %v1564, %v1676
    %1678 = vmatmul.f32.gmra.mxu0 %v1454
    %v1679 = vpop.f32.mrf.mxu0
    %v1680 = vadd.f32 %v1567, %v1679
    %1681 = vmatmul.f32.gmra.mxu0 %v1457
    %v1682 = vpop.f32.mrf.mxu0
    %v1683 = vadd.f32 %v1570, %v1682
    %1684 = vmatmul.f32.gmra.mxu0 %v1460
    %v1685 = vpop.f32.mrf.mxu0
    %v1686 = vadd.f32 %v1573, %v1685
    %1687 = vdwg.mxu0
    %1688 = vmatpush.msra.mxu0 %v1342
    %1689 = vmatpush.msra.mxu0 %v1340
    %1690 = vmatpush.msra.mxu0 %v1338
    %1691 = vmatpush.msra.mxu0 %v1336
    %1692 = vmatpush.msra.mxu0 %v1334
    %1693 = vmatpush.msra.mxu0 %v1332
    %1694 = vmatpush.msra.mxu0 %v1330
    %1695 = vmatpush.msra.mxu0 %v1328
    %1696 = vmatpush.msra.mxu0 %v1326
    %1697 = vmatpush.msra.mxu0 %v1324
    %1698 = vmatpush.msra.mxu0 %v1322
    %1699 = vmatpush.msra.mxu0 %v1320
    %1700 = vmatpush.msra.mxu0 %v1318
    %1701 = vmatpush.msra.mxu0 %v1316
    %1702 = vmatpush.msra.mxu0 %v1314
    %1703 = vmatpush.msra.mxu0 %v1312
    %1704 = vmatmul.f32.gmra.mxu0 %v1247
    %v1705 = vpop.f32.mrf.mxu0
    %v1706 = vadd.f32 %v1362, %v1705
    %1707 = vmatmul.f32.gmra.mxu0 %v1249
    %v1708 = vpop.f32.mrf.mxu0
    %v1709 = vadd.f32 %v1362, %v1708
    %1710 = vmatmul.f32.gmra.mxu0 %v1251
    %v1711 = vpop.f32.mrf.mxu0
    %v1712 = vadd.f32 %v1362, %v1711
    %1713 = vmatmul.f32.gmra.mxu0 %v1253
    %v1714 = vpop.f32.mrf.mxu0
    %v1715 = vadd.f32 %v1362, %v1714
    %1716 = vmatmul.f32.gmra.mxu0 %v1255
    %v1717 = vpop.f32.mrf.mxu0
    %v1718 = vadd.f32 %v1362, %v1717
    %1719 = vmatmul.f32.gmra.mxu0 %v1257
    %v1720 = vpop.f32.mrf.mxu0
    %v1721 = vadd.f32 %v1362, %v1720
    %1722 = vmatmul.f32.gmra.mxu0 %v1259
    %v1723 = vpop.f32.mrf.mxu0
    %v1724 = vadd.f32 %v1362, %v1723
    %1725 = vmatmul.f32.gmra.mxu0 %v1261
    %v1726 = vpop.f32.mrf.mxu0
    %v1727 = vadd.f32 %v1362, %v1726
    %1728 = vmatmul.f32.gmra.mxu0 %v1263
    %v1729 = vpop.f32.mrf.mxu0
    %v1730 = vadd.f32 %v1362, %v1729
    %1731 = vmatmul.f32.gmra.mxu0 %v1265
    %v1732 = vpop.f32.mrf.mxu0
    %v1733 = vadd.f32 %v1362, %v1732
    %1734 = vmatmul.f32.gmra.mxu0 %v1267
    %v1735 = vpop.f32.mrf.mxu0
    %v1736 = vadd.f32 %v1362, %v1735
    %1737 = vmatmul.f32.gmra.mxu0 %v1269
    %v1738 = vpop.f32.mrf.mxu0
    %v1739 = vadd.f32 %v1362, %v1738
    %1740 = vmatmul.f32.gmra.mxu0 %v1271
    %v1741 = vpop.f32.mrf.mxu0
    %v1742 = vadd.f32 %v1362, %v1741
    %1743 = vmatmul.f32.gmra.mxu0 %v1273
    %v1744 = vpop.f32.mrf.mxu0
    %v1745 = vadd.f32 %v1362, %v1744
    %1746 = vmatmul.f32.gmra.mxu0 %v1275
    %v1747 = vpop.f32.mrf.mxu0
    %v1748 = vadd.f32 %v1362, %v1747
    %1749 = vmatmul.f32.gmra.mxu0 %v1277
    %v1750 = vpop.f32.mrf.mxu0
    %v1751 = vadd.f32 %v1362, %v1750
    %1752 = vmatmul.f32.gmra.mxu0 %v1279
    %v1753 = vpop.f32.mrf.mxu0
    %v1754 = vadd.f32 %v1362, %v1753
    %1755 = vmatmul.f32.gmra.mxu0 %v1281
    %v1756 = vpop.f32.mrf.mxu0
    %v1757 = vadd.f32 %v1362, %v1756
    %1758 = vmatmul.f32.gmra.mxu0 %v1283
    %v1759 = vpop.f32.mrf.mxu0
    %v1760 = vadd.f32 %v1362, %v1759
    %1761 = vmatmul.f32.gmra.mxu0 %v1285
    %v1762 = vpop.f32.mrf.mxu0
    %v1763 = vadd.f32 %v1362, %v1762
    %1764 = vmatmul.f32.gmra.mxu0 %v1287
    %v1765 = vpop.f32.mrf.mxu0
    %v1766 = vadd.f32 %v1362, %v1765
    %1767 = vmatmul.f32.gmra.mxu0 %v1289
    %v1768 = vpop.f32.mrf.mxu0
    %v1769 = vadd.f32 %v1362, %v1768
    %1770 = vmatmul.f32.gmra.mxu0 %v1291
    %v1771 = vpop.f32.mrf.mxu0
    %v1772 = vadd.f32 %v1362, %v1771
    %1773 = vmatmul.f32.gmra.mxu0 %v1293
    %v1774 = vpop.f32.mrf.mxu0
    %v1775 = vadd.f32 %v1362, %v1774
    %1776 = vmatmul.f32.gmra.mxu0 %v1295
    %v1777 = vpop.f32.mrf.mxu0
    %v1778 = vadd.f32 %v1362, %v1777
    %1779 = vmatmul.f32.gmra.mxu0 %v1297
    %v1780 = vpop.f32.mrf.mxu0
    %v1781 = vadd.f32 %v1362, %v1780
    %1782 = vmatmul.f32.gmra.mxu0 %v1299
    %v1783 = vpop.f32.mrf.mxu0
    %v1784 = vadd.f32 %v1362, %v1783
    %1785 = vmatmul.f32.gmra.mxu0 %v1301
    %v1786 = vpop.f32.mrf.mxu0
    %v1787 = vadd.f32 %v1362, %v1786
    %1788 = vmatmul.f32.gmra.mxu0 %v1303
    %v1789 = vpop.f32.mrf.mxu0
    %v1790 = vadd.f32 %v1362, %v1789
    %1791 = vmatmul.f32.gmra.mxu0 %v1305
    %v1792 = vpop.f32.mrf.mxu0
    %v1793 = vadd.f32 %v1362, %v1792
    %1794 = vmatmul.f32.gmra.mxu0 %v1307
    %v1795 = vpop.f32.mrf.mxu0
    %v1796 = vadd.f32 %v1362, %v1795
    %1797 = vmatmul.f32.gmra.mxu0 %v1309
    %v1798 = vpop.f32.mrf.mxu0
    %v1799 = vadd.f32 %v1362, %v1798
    %1800 = vdwg.mxu0
    %1801 = vmatpush.msra.mxu0 0.0
    %1802 = vmatpush.msra.mxu0 0.0
    %1803 = vmatpush.msra.mxu0 0.0
    %1804 = vmatpush.msra.mxu0 0.0
    %1805 = vmatpush.msra.mxu0 0.0
    %1806 = vmatpush.msra.mxu0 0.0
    %1807 = vmatpush.msra.mxu0 0.0
    %1808 = vmatpush.msra.mxu0 0.0
    %1809 = vmatpush.msra.mxu0 %v1358
    %1810 = vmatpush.msra.mxu0 %v1356
    %1811 = vmatpush.msra.mxu0 %v1354
    %1812 = vmatpush.msra.mxu0 %v1352
    %1813 = vmatpush.msra.mxu0 %v1350
    %1814 = vmatpush.msra.mxu0 %v1348
    %1815 = vmatpush.msra.mxu0 %v1346
    %1816 = vmatpush.msra.mxu0 %v1344
    %1817 = vmatmul.f32.gmra.mxu0 %v1367
    %v1818 = vpop.f32.mrf.mxu0
    %v1819 = vadd.f32 %v1706, %v1818
    %1820 = vmatmul.f32.gmra.mxu0 %v1370
    %v1821 = vpop.f32.mrf.mxu0
    %v1822 = vadd.f32 %v1709, %v1821
    %1823 = vmatmul.f32.gmra.mxu0 %v1373
    %v1824 = vpop.f32.mrf.mxu0
    %v1825 = vadd.f32 %v1712, %v1824
    %1826 = vmatmul.f32.gmra.mxu0 %v1376
    %v1827 = vpop.f32.mrf.mxu0
    %v1828 = vadd.f32 %v1715, %v1827
    %1829 = vmatmul.f32.gmra.mxu0 %v1379
    %v1830 = vpop.f32.mrf.mxu0
    %v1831 = vadd.f32 %v1718, %v1830
    %1832 = vmatmul.f32.gmra.mxu0 %v1382
    %v1833 = vpop.f32.mrf.mxu0
    %v1834 = vadd.f32 %v1721, %v1833
    %1835 = vmatmul.f32.gmra.mxu0 %v1385
    %v1836 = vpop.f32.mrf.mxu0
    %v1837 = vadd.f32 %v1724, %v1836
    %1838 = vmatmul.f32.gmra.mxu0 %v1388
    %v1839 = vpop.f32.mrf.mxu0
    %v1840 = vadd.f32 %v1727, %v1839
    %1841 = vmatmul.f32.gmra.mxu0 %v1391
    %v1842 = vpop.f32.mrf.mxu0
    %v1843 = vadd.f32 %v1730, %v1842
    %1844 = vmatmul.f32.gmra.mxu0 %v1394
    %v1845 = vpop.f32.mrf.mxu0
    %v1846 = vadd.f32 %v1733, %v1845
    %1847 = vmatmul.f32.gmra.mxu0 %v1397
    %v1848 = vpop.f32.mrf.mxu0
    %v1849 = vadd.f32 %v1736, %v1848
    %1850 = vmatmul.f32.gmra.mxu0 %v1400
    %v1851 = vpop.f32.mrf.mxu0
    %v1852 = vadd.f32 %v1739, %v1851
    %1853 = vmatmul.f32.gmra.mxu0 %v1403
    %v1854 = vpop.f32.mrf.mxu0
    %v1855 = vadd.f32 %v1742, %v1854
    %1856 = vmatmul.f32.gmra.mxu0 %v1406
    %v1857 = vpop.f32.mrf.mxu0
    %v1858 = vadd.f32 %v1745, %v1857
    %1859 = vmatmul.f32.gmra.mxu0 %v1409
    %v1860 = vpop.f32.mrf.mxu0
    %v1861 = vadd.f32 %v1748, %v1860
    %1862 = vmatmul.f32.gmra.mxu0 %v1412
    %v1863 = vpop.f32.mrf.mxu0
    %v1864 = vadd.f32 %v1751, %v1863
    %1865 = vmatmul.f32.gmra.mxu0 %v1415
    %v1866 = vpop.f32.mrf.mxu0
    %v1867 = vadd.f32 %v1754, %v1866
    %1868 = vmatmul.f32.gmra.mxu0 %v1418
    %v1869 = vpop.f32.mrf.mxu0
    %v1870 = vadd.f32 %v1757, %v1869
    %1871 = vmatmul.f32.gmra.mxu0 %v1421
    %v1872 = vpop.f32.mrf.mxu0
    %v1873 = vadd.f32 %v1760, %v1872
    %1874 = vmatmul.f32.gmra.mxu0 %v1424
    %v1875 = vpop.f32.mrf.mxu0
    %v1876 = vadd.f32 %v1763, %v1875
    %1877 = vmatmul.f32.gmra.mxu0 %v1427
    %v1878 = vpop.f32.mrf.mxu0
    %v1879 = vadd.f32 %v1766, %v1878
    %1880 = vmatmul.f32.gmra.mxu0 %v1430
    %v1881 = vpop.f32.mrf.mxu0
    %v1882 = vadd.f32 %v1769, %v1881
    %1883 = vmatmul.f32.gmra.mxu0 %v1433
    %v1884 = vpop.f32.mrf.mxu0
    %v1885 = vadd.f32 %v1772, %v1884
    %1886 = vmatmul.f32.gmra.mxu0 %v1436
    %v1887 = vpop.f32.mrf.mxu0
    %v1888 = vadd.f32 %v1775, %v1887
    %1889 = vmatmul.f32.gmra.mxu0 %v1439
    %v1890 = vpop.f32.mrf.mxu0
    %v1891 = vadd.f32 %v1778, %v1890
    %1892 = vmatmul.f32.gmra.mxu0 %v1442
    %v1893 = vpop.f32.mrf.mxu0
    %v1894 = vadd.f32 %v1781, %v1893
    %1895 = vmatmul.f32.gmra.mxu0 %v1445
    %v1896 = vpop.f32.mrf.mxu0
    %v1897 = vadd.f32 %v1784, %v1896
    %1898 = vmatmul.f32.gmra.mxu0 %v1448
    %v1899 = vpop.f32.mrf.mxu0
    %v1900 = vadd.f32 %v1787, %v1899
    %1901 = vmatmul.f32.gmra.mxu0 %v1451
    %v1902 = vpop.f32.mrf.mxu0
    %v1903 = vadd.f32 %v1790, %v1902
    %1904 = vmatmul.f32.gmra.mxu0 %v1454
    %v1905 = vpop.f32.mrf.mxu0
    %v1906 = vadd.f32 %v1793, %v1905
    %1907 = vmatmul.f32.gmra.mxu0 %v1457
    %v1908 = vpop.f32.mrf.mxu0
    %v1909 = vadd.f32 %v1796, %v1908
    %1910 = vmatmul.f32.gmra.mxu0 %v1460
    %v1911 = vpop.f32.mrf.mxu0
    %v1912 = vadd.f32 %v1799, %v1911
    %1913 = vdwg.mxu0
    %v1914 = vmax.f32 %v1593, 0.0
    %v1915 = vmax.f32 %v1819, 0.0
    %v1916 = vmax.f32 %v1596, 0.0
    %v1917 = vmax.f32 %v1822, 0.0
    %v1918 = vmax.f32 %v1599, 0.0
    %v1919 = vmax.f32 %v1825, 0.0
    %v1920 = vmax.f32 %v1602, 0.0
    %v1921 = vmax.f32 %v1828, 0.0
    %v1922 = vmax.f32 %v1605, 0.0
    %v1923 = vmax.f32 %v1831, 0.0
    %v1924 = vmax.f32 %v1608, 0.0
    %v1925 = vmax.f32 %v1834, 0.0
    %v1926 = vmax.f32 %v1611, 0.0
    %v1927 = vmax.f32 %v1837, 0.0
    %v1928 = vmax.f32 %v1614, 0.0
    %v1929 = vmax.f32 %v1840, 0.0
    %v1930 = vmax.f32 %v1617, 0.0
    %v1931 = vmax.f32 %v1843, 0.0
    %v1932 = vmax.f32 %v1620, 0.0
    %v1933 = vmax.f32 %v1846, 0.0
    %v1934 = vmax.f32 %v1623, 0.0
    %v1935 = vmax.f32 %v1849, 0.0
    %v1936 = vmax.f32 %v1626, 0.0
    %v1937 = vmax.f32 %v1852, 0.0
    %v1938 = vmax.f32 %v1629, 0.0
    %v1939 = vmax.f32 %v1855, 0.0
    %v1940 = vmax.f32 %v1632, 0.0
    %v1941 = vmax.f32 %v1858, 0.0
    %v1942 = vmax.f32 %v1635, 0.0
    %v1943 = vmax.f32 %v1861, 0.0
    %v1944 = vmax.f32 %v1638, 0.0
    %v1945 = vmax.f32 %v1864, 0.0
    %v1946 = vmax.f32 %v1641, 0.0
    %v1947 = vmax.f32 %v1867, 0.0
    %v1948 = vmax.f32 %v1644, 0.0
    %v1949 = vmax.f32 %v1870, 0.0
    %v1950 = vmax.f32 %v1647, 0.0
    %v1951 = vmax.f32 %v1873, 0.0
    %v1952 = vmax.f32 %v1650, 0.0
    %v1953 = vmax.f32 %v1876, 0.0
    %v1954 = vmax.f32 %v1653, 0.0
    %v1955 = vmax.f32 %v1879, 0.0
    %v1956 = vmax.f32 %v1656, 0.0
    %v1957 = vmax.f32 %v1882, 0.0
    %v1958 = vmax.f32 %v1659, 0.0
    %v1959 = vmax.f32 %v1885, 0.0
    %v1960 = vmax.f32 %v1662, 0.0
    %v1961 = vmax.f32 %v1888, 0.0
    %v1962 = vmax.f32 %v1665, 0.0
    %v1963 = vmax.f32 %v1891, 0.0
    %v1964 = vmax.f32 %v1668, 0.0
    %v1965 = vmax.f32 %v1894, 0.0
    %v1966 = vmax.f32 %v1671, 0.0
    %v1967 = vmax.f32 %v1897, 0.0
    %v1968 = vmax.f32 %v1674, 0.0
    %v1969 = vmax.f32 %v1900, 0.0
    %v1970 = vmax.f32 %v1677, 0.0
    %v1971 = vmax.f32 %v1903, 0.0
    %v1972 = vmax.f32 %v1680, 0.0
    %v1973 = vmax.f32 %v1906, 0.0
    %v1974 = vmax.f32 %v1683, 0.0
    %v1975 = vmax.f32 %v1909, 0.0
    %v1976 = vmax.f32 %v1686, 0.0
    %v1977 = vmax.f32 %v1912, 0.0
    %v1978 = vld [vmem:[%s9] sm:$0xff]
    %v1979 = vld [vmem:[%s9 + $0x8] sm:$0xff]
    %v1980 = vld [vmem:[%s9 + $0x10] sm:$0xff]
    %v1981 = vld [vmem:[%s9 + $0x18] sm:$0xff]
    %v1982 = vld [vmem:[%s9 + $0x20] sm:$0xff]
    %v1983 = vld [vmem:[%s9 + $0x28] sm:$0xff]
    %v1984 = vld [vmem:[%s9 + $0x30] sm:$0xff]
    %v1985 = vld [vmem:[%s9 + $0x38] sm:$0xff]
    %v1986 = vld [vmem:[%s9 + $0x40] sm:$0xff]
    %v1987 = vld [vmem:[%s9 + $0x48] sm:$0xff]
    %v1988 = vld [vmem:[%s9 + $0x50] sm:$0xff]
    %v1989 = vld [vmem:[%s9 + $0x58] sm:$0xff]
    %v1990 = vld [vmem:[%s9 + $0x60] sm:$0xff]
    %v1991 = vld [vmem:[%s9 + $0x68] sm:$0xff]
    %v1992 = vld [vmem:[%s9 + $0x70] sm:$0xff]
    %v1993 = vld [vmem:[%s9 + $0x78] sm:$0xff]
    %v1994 = vld [vmem:[%s9 + $0x80] sm:$0xff]
    %v1995 = vld [vmem:[%s9 + $0x88] sm:$0xff]
    %v1996 = vld [vmem:[%s9 + $0x90] sm:$0xff]
    %v1997 = vld [vmem:[%s9 + $0x98] sm:$0xff]
    %v1998 = vld [vmem:[%s9 + $0xa0] sm:$0xff]
    %v1999 = vld [vmem:[%s9 + $0xa8] sm:$0xff]
    %v2000 = vld [vmem:[%s9 + $0xb0] sm:$0xff]
    %v2001 = vld [vmem:[%s9 + $0xb8] sm:$0xff]
    %v2002 = vld [vmem:[%s10] sm:$0x1]
    %v2004 = vperm.slane %v2002, 0
    %v2007 = vsel %vm1365, %v1915, 0
    %v2010 = vsel %vm1365, %v1917, 0
    %v2013 = vsel %vm1365, %v1919, 0
    %v2016 = vsel %vm1365, %v1921, 0
    %v2019 = vsel %vm1365, %v1923, 0
    %v2022 = vsel %vm1365, %v1925, 0
    %v2025 = vsel %vm1365, %v1927, 0
    %v2028 = vsel %vm1365, %v1929, 0
    %v2031 = vsel %vm1365, %v1931, 0
    %v2034 = vsel %vm1365, %v1933, 0
    %v2037 = vsel %vm1365, %v1935, 0
    %v2040 = vsel %vm1365, %v1937, 0
    %v2043 = vsel %vm1365, %v1939, 0
    %v2046 = vsel %vm1365, %v1941, 0
    %v2049 = vsel %vm1365, %v1943, 0
    %v2052 = vsel %vm1365, %v1945, 0
    %v2055 = vsel %vm1365, %v1947, 0
    %v2058 = vsel %vm1365, %v1949, 0
    %v2061 = vsel %vm1365, %v1951, 0
    %v2064 = vsel %vm1365, %v1953, 0
    %v2067 = vsel %vm1365, %v1955, 0
    %v2070 = vsel %vm1365, %v1957, 0
    %v2073 = vsel %vm1365, %v1959, 0
    %v2076 = vsel %vm1365, %v1961, 0
    %v2079 = vsel %vm1365, %v1963, 0
    %v2082 = vsel %vm1365, %v1965, 0
    %v2085 = vsel %vm1365, %v1967, 0
    %v2088 = vsel %vm1365, %v1969, 0
    %v2091 = vsel %vm1365, %v1971, 0
    %v2094 = vsel %vm1365, %v1973, 0
    %v2097 = vsel %vm1365, %v1975, 0
    %v2100 = vsel %vm1365, %v1977, 0
    %2102 = vmatpush.msra.mxu0 %v1993
    %2103 = vmatpush.msra.mxu0 %v1992
    %2104 = vmatpush.msra.mxu0 %v1991
    %2105 = vmatpush.msra.mxu0 %v1990
    %2106 = vmatpush.msra.mxu0 %v1989
    %2107 = vmatpush.msra.mxu0 %v1988
    %2108 = vmatpush.msra.mxu0 %v1987
    %2109 = vmatpush.msra.mxu0 %v1986
    %2110 = vmatpush.msra.mxu0 %v1985
    %2111 = vmatpush.msra.mxu0 %v1984
    %2112 = vmatpush.msra.mxu0 %v1983
    %2113 = vmatpush.msra.mxu0 %v1982
    %2114 = vmatpush.msra.mxu0 %v1981
    %2115 = vmatpush.msra.mxu0 %v1980
    %2116 = vmatpush.msra.mxu0 %v1979
    %2117 = vmatpush.msra.mxu0 %v1978
    %2118 = vmatmul.f32.gmra.mxu0 %v1914
    %v2119 = vpop.f32.mrf.mxu0
    %v2120 = vadd.f32 %v2004, %v2119
    %2121 = vmatmul.f32.gmra.mxu0 %v1916
    %v2122 = vpop.f32.mrf.mxu0
    %v2123 = vadd.f32 %v2004, %v2122
    %2124 = vmatmul.f32.gmra.mxu0 %v1918
    %v2125 = vpop.f32.mrf.mxu0
    %v2126 = vadd.f32 %v2004, %v2125
    %2127 = vmatmul.f32.gmra.mxu0 %v1920
    %v2128 = vpop.f32.mrf.mxu0
    %v2129 = vadd.f32 %v2004, %v2128
    %2130 = vmatmul.f32.gmra.mxu0 %v1922
    %v2131 = vpop.f32.mrf.mxu0
    %v2132 = vadd.f32 %v2004, %v2131
    %2133 = vmatmul.f32.gmra.mxu0 %v1924
    %v2134 = vpop.f32.mrf.mxu0
    %v2135 = vadd.f32 %v2004, %v2134
    %2136 = vmatmul.f32.gmra.mxu0 %v1926
    %v2137 = vpop.f32.mrf.mxu0
    %v2138 = vadd.f32 %v2004, %v2137
    %2139 = vmatmul.f32.gmra.mxu0 %v1928
    %v2140 = vpop.f32.mrf.mxu0
    %v2141 = vadd.f32 %v2004, %v2140
    %2142 = vmatmul.f32.gmra.mxu0 %v1930
    %v2143 = vpop.f32.mrf.mxu0
    %v2144 = vadd.f32 %v2004, %v2143
    %2145 = vmatmul.f32.gmra.mxu0 %v1932
    %v2146 = vpop.f32.mrf.mxu0
    %v2147 = vadd.f32 %v2004, %v2146
    %2148 = vmatmul.f32.gmra.mxu0 %v1934
    %v2149 = vpop.f32.mrf.mxu0
    %v2150 = vadd.f32 %v2004, %v2149
    %2151 = vmatmul.f32.gmra.mxu0 %v1936
    %v2152 = vpop.f32.mrf.mxu0
    %v2153 = vadd.f32 %v2004, %v2152
    %2154 = vmatmul.f32.gmra.mxu0 %v1938
    %v2155 = vpop.f32.mrf.mxu0
    %v2156 = vadd.f32 %v2004, %v2155
    %2157 = vmatmul.f32.gmra.mxu0 %v1940
    %v2158 = vpop.f32.mrf.mxu0
    %v2159 = vadd.f32 %v2004, %v2158
    %2160 = vmatmul.f32.gmra.mxu0 %v1942
    %v2161 = vpop.f32.mrf.mxu0
    %v2162 = vadd.f32 %v2004, %v2161
    %2163 = vmatmul.f32.gmra.mxu0 %v1944
    %v2164 = vpop.f32.mrf.mxu0
    %v2165 = vadd.f32 %v2004, %v2164
    %2166 = vmatmul.f32.gmra.mxu0 %v1946
    %v2167 = vpop.f32.mrf.mxu0
    %v2168 = vadd.f32 %v2004, %v2167
    %2169 = vmatmul.f32.gmra.mxu0 %v1948
    %v2170 = vpop.f32.mrf.mxu0
    %v2171 = vadd.f32 %v2004, %v2170
    %2172 = vmatmul.f32.gmra.mxu0 %v1950
    %v2173 = vpop.f32.mrf.mxu0
    %v2174 = vadd.f32 %v2004, %v2173
    %2175 = vmatmul.f32.gmra.mxu0 %v1952
    %v2176 = vpop.f32.mrf.mxu0
    %v2177 = vadd.f32 %v2004, %v2176
    %2178 = vmatmul.f32.gmra.mxu0 %v1954
    %v2179 = vpop.f32.mrf.mxu0
    %v2180 = vadd.f32 %v2004, %v2179
    %2181 = vmatmul.f32.gmra.mxu0 %v1956
    %v2182 = vpop.f32.mrf.mxu0
    %v2183 = vadd.f32 %v2004, %v2182
    %2184 = vmatmul.f32.gmra.mxu0 %v1958
    %v2185 = vpop.f32.mrf.mxu0
    %v2186 = vadd.f32 %v2004, %v2185
    %2187 = vmatmul.f32.gmra.mxu0 %v1960
    %v2188 = vpop.f32.mrf.mxu0
    %v2189 = vadd.f32 %v2004, %v2188
    %2190 = vmatmul.f32.gmra.mxu0 %v1962
    %v2191 = vpop.f32.mrf.mxu0
    %v2192 = vadd.f32 %v2004, %v2191
    %2193 = vmatmul.f32.gmra.mxu0 %v1964
    %v2194 = vpop.f32.mrf.mxu0
    %v2195 = vadd.f32 %v2004, %v2194
    %2196 = vmatmul.f32.gmra.mxu0 %v1966
    %v2197 = vpop.f32.mrf.mxu0
    %v2198 = vadd.f32 %v2004, %v2197
    %2199 = vmatmul.f32.gmra.mxu0 %v1968
    %v2200 = vpop.f32.mrf.mxu0
    %v2201 = vadd.f32 %v2004, %v2200
    %2202 = vmatmul.f32.gmra.mxu0 %v1970
    %v2203 = vpop.f32.mrf.mxu0
    %v2204 = vadd.f32 %v2004, %v2203
    %2205 = vmatmul.f32.gmra.mxu0 %v1972
    %v2206 = vpop.f32.mrf.mxu0
    %v2207 = vadd.f32 %v2004, %v2206
    %2208 = vmatmul.f32.gmra.mxu0 %v1974
    %v2209 = vpop.f32.mrf.mxu0
    %v2210 = vadd.f32 %v2004, %v2209
    %2211 = vmatmul.f32.gmra.mxu0 %v1976
    %v2212 = vpop.f32.mrf.mxu0
    %v2213 = vadd.f32 %v2004, %v2212
    %2214 = vdwg.mxu0
    %2215 = vmatpush.msra.mxu0 0.0
    %2216 = vmatpush.msra.mxu0 0.0
    %2217 = vmatpush.msra.mxu0 0.0
    %2218 = vmatpush.msra.mxu0 0.0
    %2219 = vmatpush.msra.mxu0 0.0
    %2220 = vmatpush.msra.mxu0 0.0
    %2221 = vmatpush.msra.mxu0 0.0
    %2222 = vmatpush.msra.mxu0 0.0
    %2223 = vmatpush.msra.mxu0 %v2001
    %2224 = vmatpush.msra.mxu0 %v2000
    %2225 = vmatpush.msra.mxu0 %v1999
    %2226 = vmatpush.msra.mxu0 %v1998
    %2227 = vmatpush.msra.mxu0 %v1997
    %2228 = vmatpush.msra.mxu0 %v1996
    %2229 = vmatpush.msra.mxu0 %v1995
    %2230 = vmatpush.msra.mxu0 %v1994
    %2231 = vmatmul.f32.gmra.mxu0 %v2007
    %v2232 = vpop.f32.mrf.mxu0
    %v2233 = vadd.f32 %v2120, %v2232
    %2234 = vmatmul.f32.gmra.mxu0 %v2010
    %v2235 = vpop.f32.mrf.mxu0
    %v2236 = vadd.f32 %v2123, %v2235
    %2237 = vmatmul.f32.gmra.mxu0 %v2013
    %v2238 = vpop.f32.mrf.mxu0
    %v2239 = vadd.f32 %v2126, %v2238
    %2240 = vmatmul.f32.gmra.mxu0 %v2016
    %v2241 = vpop.f32.mrf.mxu0
    %v2242 = vadd.f32 %v2129, %v2241
    %2243 = vmatmul.f32.gmra.mxu0 %v2019
    %v2244 = vpop.f32.mrf.mxu0
    %v2245 = vadd.f32 %v2132, %v2244
    %2246 = vmatmul.f32.gmra.mxu0 %v2022
    %v2247 = vpop.f32.mrf.mxu0
    %v2248 = vadd.f32 %v2135, %v2247
    %2249 = vmatmul.f32.gmra.mxu0 %v2025
    %v2250 = vpop.f32.mrf.mxu0
    %v2251 = vadd.f32 %v2138, %v2250
    %2252 = vmatmul.f32.gmra.mxu0 %v2028
    %v2253 = vpop.f32.mrf.mxu0
    %v2254 = vadd.f32 %v2141, %v2253
    %2255 = vmatmul.f32.gmra.mxu0 %v2031
    %v2256 = vpop.f32.mrf.mxu0
    %v2257 = vadd.f32 %v2144, %v2256
    %2258 = vmatmul.f32.gmra.mxu0 %v2034
    %v2259 = vpop.f32.mrf.mxu0
    %v2260 = vadd.f32 %v2147, %v2259
    %2261 = vmatmul.f32.gmra.mxu0 %v2037
    %v2262 = vpop.f32.mrf.mxu0
    %v2263 = vadd.f32 %v2150, %v2262
    %2264 = vmatmul.f32.gmra.mxu0 %v2040
    %v2265 = vpop.f32.mrf.mxu0
    %v2266 = vadd.f32 %v2153, %v2265
    %2267 = vmatmul.f32.gmra.mxu0 %v2043
    %v2268 = vpop.f32.mrf.mxu0
    %v2269 = vadd.f32 %v2156, %v2268
    %2270 = vmatmul.f32.gmra.mxu0 %v2046
    %v2271 = vpop.f32.mrf.mxu0
    %v2272 = vadd.f32 %v2159, %v2271
    %2273 = vmatmul.f32.gmra.mxu0 %v2049
    %v2274 = vpop.f32.mrf.mxu0
    %v2275 = vadd.f32 %v2162, %v2274
    %2276 = vmatmul.f32.gmra.mxu0 %v2052
    %v2277 = vpop.f32.mrf.mxu0
    %v2278 = vadd.f32 %v2165, %v2277
    %2279 = vmatmul.f32.gmra.mxu0 %v2055
    %v2280 = vpop.f32.mrf.mxu0
    %v2281 = vadd.f32 %v2168, %v2280
    %2282 = vmatmul.f32.gmra.mxu0 %v2058
    %v2283 = vpop.f32.mrf.mxu0
    %v2284 = vadd.f32 %v2171, %v2283
    %2285 = vmatmul.f32.gmra.mxu0 %v2061
    %v2286 = vpop.f32.mrf.mxu0
    %v2287 = vadd.f32 %v2174, %v2286
    %2288 = vmatmul.f32.gmra.mxu0 %v2064
    %v2289 = vpop.f32.mrf.mxu0
    %v2290 = vadd.f32 %v2177, %v2289
    %2291 = vmatmul.f32.gmra.mxu0 %v2067
    %v2292 = vpop.f32.mrf.mxu0
    %v2293 = vadd.f32 %v2180, %v2292
    %2294 = vmatmul.f32.gmra.mxu0 %v2070
    %v2295 = vpop.f32.mrf.mxu0
    %v2296 = vadd.f32 %v2183, %v2295
    %2297 = vmatmul.f32.gmra.mxu0 %v2073
    %v2298 = vpop.f32.mrf.mxu0
    %v2299 = vadd.f32 %v2186, %v2298
    %2300 = vmatmul.f32.gmra.mxu0 %v2076
    %v2301 = vpop.f32.mrf.mxu0
    %v2302 = vadd.f32 %v2189, %v2301
    %2303 = vmatmul.f32.gmra.mxu0 %v2079
    %v2304 = vpop.f32.mrf.mxu0
    %v2305 = vadd.f32 %v2192, %v2304
    %2306 = vmatmul.f32.gmra.mxu0 %v2082
    %v2307 = vpop.f32.mrf.mxu0
    %v2308 = vadd.f32 %v2195, %v2307
    %2309 = vmatmul.f32.gmra.mxu0 %v2085
    %v2310 = vpop.f32.mrf.mxu0
    %v2311 = vadd.f32 %v2198, %v2310
    %2312 = vmatmul.f32.gmra.mxu0 %v2088
    %v2313 = vpop.f32.mrf.mxu0
    %v2314 = vadd.f32 %v2201, %v2313
    %2315 = vmatmul.f32.gmra.mxu0 %v2091
    %v2316 = vpop.f32.mrf.mxu0
    %v2317 = vadd.f32 %v2204, %v2316
    %2318 = vmatmul.f32.gmra.mxu0 %v2094
    %v2319 = vpop.f32.mrf.mxu0
    %v2320 = vadd.f32 %v2207, %v2319
    %2321 = vmatmul.f32.gmra.mxu0 %v2097
    %v2322 = vpop.f32.mrf.mxu0
    %v2323 = vadd.f32 %v2210, %v2322
    %2324 = vmatmul.f32.gmra.mxu0 %v2100
    %v2325 = vpop.f32.mrf.mxu0
    %v2326 = vadd.f32 %v2213, %v2325
    %2327 = vdwg.mxu0
    %v2328 = vlaneseq
    %v2329 = vand.u32 %v2328, 127
    %vm2330 = vcmp.lt.s32.totalorder %v2329, 1
    %v2331 = vxor.u32 %v2233, 2147483648
    %v2332 = vxor.u32 %v2236, 2147483648
    %v2333 = vxor.u32 %v2239, 2147483648
    %v2334 = vxor.u32 %v2242, 2147483648
    %v2335 = vxor.u32 %v2245, 2147483648
    %v2336 = vxor.u32 %v2248, 2147483648
    %v2337 = vxor.u32 %v2251, 2147483648
    %v2338 = vxor.u32 %v2254, 2147483648
    %v2339 = vxor.u32 %v2257, 2147483648
    %v2340 = vxor.u32 %v2260, 2147483648
    %v2341 = vxor.u32 %v2263, 2147483648
    %v2342 = vxor.u32 %v2266, 2147483648
    %v2343 = vxor.u32 %v2269, 2147483648
    %v2344 = vxor.u32 %v2272, 2147483648
    %v2345 = vxor.u32 %v2275, 2147483648
    %v2346 = vxor.u32 %v2278, 2147483648
    %v2347 = vxor.u32 %v2281, 2147483648
    %v2348 = vxor.u32 %v2284, 2147483648
    %v2349 = vxor.u32 %v2287, 2147483648
    %v2350 = vxor.u32 %v2290, 2147483648
    %v2351 = vxor.u32 %v2293, 2147483648
    %v2352 = vxor.u32 %v2296, 2147483648
    %v2353 = vxor.u32 %v2299, 2147483648
    %v2354 = vxor.u32 %v2302, 2147483648
    %v2355 = vxor.u32 %v2305, 2147483648
    %v2356 = vxor.u32 %v2308, 2147483648
    %v2357 = vxor.u32 %v2311, 2147483648
    %v2358 = vxor.u32 %v2314, 2147483648
    %v2359 = vxor.u32 %v2317, 2147483648
    %v2360 = vxor.u32 %v2320, 2147483648
    %v2361 = vxor.u32 %v2323, 2147483648
    %v2362 = vxor.u32 %v2326, 2147483648
    %v2363 = vmul.f32 %v2331, 1.442695
    %v2364 = vpow.pop %v2363
    %v2365 = vmul.f32 %v2332, 1.442695
    %v2366 = vpow.pop %v2365
    %v2367 = vmul.f32 %v2333, 1.442695
    %v2368 = vpow.pop %v2367
    %v2369 = vmul.f32 %v2334, 1.442695
    %v2370 = vpow.pop %v2369
    %v2371 = vmul.f32 %v2335, 1.442695
    %v2372 = vpow.pop %v2371
    %v2373 = vmul.f32 %v2336, 1.442695
    %v2374 = vpow.pop %v2373
    %v2375 = vmul.f32 %v2337, 1.442695
    %v2376 = vpow.pop %v2375
    %v2377 = vmul.f32 %v2338, 1.442695
    %v2378 = vpow.pop %v2377
    %v2379 = vmul.f32 %v2339, 1.442695
    %v2380 = vpow.pop %v2379
    %v2381 = vmul.f32 %v2340, 1.442695
    %v2382 = vpow.pop %v2381
    %v2383 = vmul.f32 %v2341, 1.442695
    %v2384 = vpow.pop %v2383
    %v2385 = vmul.f32 %v2342, 1.442695
    %v2386 = vpow.pop %v2385
    %v2387 = vmul.f32 %v2343, 1.442695
    %v2388 = vpow.pop %v2387
    %v2389 = vmul.f32 %v2344, 1.442695
    %v2390 = vpow.pop %v2389
    %v2391 = vmul.f32 %v2345, 1.442695
    %v2392 = vpow.pop %v2391
    %v2393 = vmul.f32 %v2346, 1.442695
    %v2394 = vpow.pop %v2393
    %v2395 = vmul.f32 %v2347, 1.442695
    %v2396 = vpow.pop %v2395
    %v2397 = vmul.f32 %v2348, 1.442695
    %v2398 = vpow.pop %v2397
    %v2399 = vmul.f32 %v2349, 1.442695
    %v2400 = vpow.pop %v2399
    %v2401 = vmul.f32 %v2350, 1.442695
    %v2402 = vpow.pop %v2401
    %v2403 = vmul.f32 %v2351, 1.442695
    %v2404 = vpow.pop %v2403
    %v2405 = vmul.f32 %v2352, 1.442695
    %v2406 = vpow.pop %v2405
    %v2407 = vmul.f32 %v2353, 1.442695
    %v2408 = vpow.pop %v2407
    %v2409 = vmul.f32 %v2354, 1.442695
    %v2410 = vpow.pop %v2409
    %v2411 = vmul.f32 %v2355, 1.442695
    %v2412 = vpow.pop %v2411
    %v2413 = vmul.f32 %v2356, 1.442695
    %v2414 = vpow.pop %v2413
    %v2415 = vmul.f32 %v2357, 1.442695
    %v2416 = vpow.pop %v2415
    %v2417 = vmul.f32 %v2358, 1.442695
    %v2418 = vpow.pop %v2417
    %v2419 = vmul.f32 %v2359, 1.442695
    %v2420 = vpow.pop %v2419
    %v2421 = vmul.f32 %v2360, 1.442695
    %v2422 = vpow.pop %v2421
    %v2423 = vmul.f32 %v2361, 1.442695
    %v2424 = vpow.pop %v2423
    %v2425 = vmul.f32 %v2362, 1.442695
    %v2426 = vpow.pop %v2425
    %v2427 = vadd.f32 %v2364, 1.0
    %v2428 = vadd.f32 %v2366, 1.0
    %v2429 = vadd.f32 %v2368, 1.0
    %v2430 = vadd.f32 %v2370, 1.0
    %v2431 = vadd.f32 %v2372, 1.0
    %v2432 = vadd.f32 %v2374, 1.0
    %v2433 = vadd.f32 %v2376, 1.0
    %v2434 = vadd.f32 %v2378, 1.0
    %v2435 = vadd.f32 %v2380, 1.0
    %v2436 = vadd.f32 %v2382, 1.0
    %v2437 = vadd.f32 %v2384, 1.0
    %v2438 = vadd.f32 %v2386, 1.0
    %v2439 = vadd.f32 %v2388, 1.0
    %v2440 = vadd.f32 %v2390, 1.0
    %v2441 = vadd.f32 %v2392, 1.0
    %v2442 = vadd.f32 %v2394, 1.0
    %v2443 = vadd.f32 %v2396, 1.0
    %v2444 = vadd.f32 %v2398, 1.0
    %v2445 = vadd.f32 %v2400, 1.0
    %v2446 = vadd.f32 %v2402, 1.0
    %v2447 = vadd.f32 %v2404, 1.0
    %v2448 = vadd.f32 %v2406, 1.0
    %v2449 = vadd.f32 %v2408, 1.0
    %v2450 = vadd.f32 %v2410, 1.0
    %v2451 = vadd.f32 %v2412, 1.0
    %v2452 = vadd.f32 %v2414, 1.0
    %v2453 = vadd.f32 %v2416, 1.0
    %v2454 = vadd.f32 %v2418, 1.0
    %v2455 = vadd.f32 %v2420, 1.0
    %v2456 = vadd.f32 %v2422, 1.0
    %v2457 = vadd.f32 %v2424, 1.0
    %v2458 = vadd.f32 %v2426, 1.0
    %v2459 = vrcp.pop %v2427
    %v2460 = vmul.f32 %v2427, %v2459
    %v2461 = vsub.f32 1.0, %v2460
    %v2462 = vmul.f32 %v2459, %v2461
    %v2463 = vadd.f32 %v2459, %v2462
    %vm2464 = vweird.f32 %v2427
    %vm2465 = vweird.f32 %v2459
    %vm2466 = vmor %vm2464, %vm2465
    %v2467 = vsel %vm2466, %v2459, %v2463
    %v2468 = vand.u32 2147483647, %v2427
    %vm2469 = vcmp.eq.f32.partialorder %v2468, 8.507059e+37
    %v2470 = vand.u32 %v2427, 2147483648
    %v2471 = vor.u32 1.1754944e-38, %v2470
    %v2472 = vsel %vm2469, %v2471, %v2467
    %v2473 = vmul.f32 1.0, %v2472
    %v2474 = vrcp.pop %v2428
    %v2475 = vmul.f32 %v2428, %v2474
    %v2476 = vsub.f32 1.0, %v2475
    %v2477 = vmul.f32 %v2474, %v2476
    %v2478 = vadd.f32 %v2474, %v2477
    %vm2479 = vweird.f32 %v2428
    %vm2480 = vweird.f32 %v2474
    %vm2481 = vmor %vm2479, %vm2480
    %v2482 = vsel %vm2481, %v2474, %v2478
    %v2483 = vand.u32 2147483647, %v2428
    %vm2484 = vcmp.eq.f32.partialorder %v2483, 8.507059e+37
    %v2485 = vand.u32 %v2428, 2147483648
    %v2486 = vor.u32 1.1754944e-38, %v2485
    %v2487 = vsel %vm2484, %v2486, %v2482
    %v2488 = vmul.f32 1.0, %v2487
    %v2489 = vrcp.pop %v2429
    %v2490 = vmul.f32 %v2429, %v2489
    %v2491 = vsub.f32 1.0, %v2490
    %v2492 = vmul.f32 %v2489, %v2491
    %v2493 = vadd.f32 %v2489, %v2492
    %vm2494 = vweird.f32 %v2429
    %vm2495 = vweird.f32 %v2489
    %vm2496 = vmor %vm2494, %vm2495
    %v2497 = vsel %vm2496, %v2489, %v2493
    %v2498 = vand.u32 2147483647, %v2429
    %vm2499 = vcmp.eq.f32.partialorder %v2498, 8.507059e+37
    %v2500 = vand.u32 %v2429, 2147483648
    %v2501 = vor.u32 1.1754944e-38, %v2500
    %v2502 = vsel %vm2499, %v2501, %v2497
    %v2503 = vmul.f32 1.0, %v2502
    %v2504 = vrcp.pop %v2430
    %v2505 = vmul.f32 %v2430, %v2504
    %v2506 = vsub.f32 1.0, %v2505
    %v2507 = vmul.f32 %v2504, %v2506
    %v2508 = vadd.f32 %v2504, %v2507
    %vm2509 = vweird.f32 %v2430
    %vm2510 = vweird.f32 %v2504
    %vm2511 = vmor %vm2509, %vm2510
    %v2512 = vsel %vm2511, %v2504, %v2508
    %v2513 = vand.u32 2147483647, %v2430
    %vm2514 = vcmp.eq.f32.partialorder %v2513, 8.507059e+37
    %v2515 = vand.u32 %v2430, 2147483648
    %v2516 = vor.u32 1.1754944e-38, %v2515
    %v2517 = vsel %vm2514, %v2516, %v2512
    %v2518 = vmul.f32 1.0, %v2517
    %v2519 = vrcp.pop %v2431
    %v2520 = vmul.f32 %v2431, %v2519
    %v2521 = vsub.f32 1.0, %v2520
    %v2522 = vmul.f32 %v2519, %v2521
    %v2523 = vadd.f32 %v2519, %v2522
    %vm2524 = vweird.f32 %v2431
    %vm2525 = vweird.f32 %v2519
    %vm2526 = vmor %vm2524, %vm2525
    %v2527 = vsel %vm2526, %v2519, %v2523
    %v2528 = vand.u32 2147483647, %v2431
    %vm2529 = vcmp.eq.f32.partialorder %v2528, 8.507059e+37
    %v2530 = vand.u32 %v2431, 2147483648
    %v2531 = vor.u32 1.1754944e-38, %v2530
    %v2532 = vsel %vm2529, %v2531, %v2527
    %v2533 = vmul.f32 1.0, %v2532
    %v2534 = vrcp.pop %v2432
    %v2535 = vmul.f32 %v2432, %v2534
    %v2536 = vsub.f32 1.0, %v2535
    %v2537 = vmul.f32 %v2534, %v2536
    %v2538 = vadd.f32 %v2534, %v2537
    %vm2539 = vweird.f32 %v2432
    %vm2540 = vweird.f32 %v2534
    %vm2541 = vmor %vm2539, %vm2540
    %v2542 = vsel %vm2541, %v2534, %v2538
    %v2543 = vand.u32 2147483647, %v2432
    %vm2544 = vcmp.eq.f32.partialorder %v2543, 8.507059e+37
    %v2545 = vand.u32 %v2432, 2147483648
    %v2546 = vor.u32 1.1754944e-38, %v2545
    %v2547 = vsel %vm2544, %v2546, %v2542
    %v2548 = vmul.f32 1.0, %v2547
    %v2549 = vrcp.pop %v2433
    %v2550 = vmul.f32 %v2433, %v2549
    %v2551 = vsub.f32 1.0, %v2550
    %v2552 = vmul.f32 %v2549, %v2551
    %v2553 = vadd.f32 %v2549, %v2552
    %vm2554 = vweird.f32 %v2433
    %vm2555 = vweird.f32 %v2549
    %vm2556 = vmor %vm2554, %vm2555
    %v2557 = vsel %vm2556, %v2549, %v2553
    %v2558 = vand.u32 2147483647, %v2433
    %vm2559 = vcmp.eq.f32.partialorder %v2558, 8.507059e+37
    %v2560 = vand.u32 %v2433, 2147483648
    %v2561 = vor.u32 1.1754944e-38, %v2560
    %v2562 = vsel %vm2559, %v2561, %v2557
    %v2563 = vmul.f32 1.0, %v2562
    %v2564 = vrcp.pop %v2434
    %v2565 = vmul.f32 %v2434, %v2564
    %v2566 = vsub.f32 1.0, %v2565
    %v2567 = vmul.f32 %v2564, %v2566
    %v2568 = vadd.f32 %v2564, %v2567
    %vm2569 = vweird.f32 %v2434
    %vm2570 = vweird.f32 %v2564
    %vm2571 = vmor %vm2569, %vm2570
    %v2572 = vsel %vm2571, %v2564, %v2568
    %v2573 = vand.u32 2147483647, %v2434
    %vm2574 = vcmp.eq.f32.partialorder %v2573, 8.507059e+37
    %v2575 = vand.u32 %v2434, 2147483648
    %v2576 = vor.u32 1.1754944e-38, %v2575
    %v2577 = vsel %vm2574, %v2576, %v2572
    %v2578 = vmul.f32 1.0, %v2577
    %v2579 = vrcp.pop %v2435
    %v2580 = vmul.f32 %v2435, %v2579
    %v2581 = vsub.f32 1.0, %v2580
    %v2582 = vmul.f32 %v2579, %v2581
    %v2583 = vadd.f32 %v2579, %v2582
    %vm2584 = vweird.f32 %v2435
    %vm2585 = vweird.f32 %v2579
    %vm2586 = vmor %vm2584, %vm2585
    %v2587 = vsel %vm2586, %v2579, %v2583
    %v2588 = vand.u32 2147483647, %v2435
    %vm2589 = vcmp.eq.f32.partialorder %v2588, 8.507059e+37
    %v2590 = vand.u32 %v2435, 2147483648
    %v2591 = vor.u32 1.1754944e-38, %v2590
    %v2592 = vsel %vm2589, %v2591, %v2587
    %v2593 = vmul.f32 1.0, %v2592
    %v2594 = vrcp.pop %v2436
    %v2595 = vmul.f32 %v2436, %v2594
    %v2596 = vsub.f32 1.0, %v2595
    %v2597 = vmul.f32 %v2594, %v2596
    %v2598 = vadd.f32 %v2594, %v2597
    %vm2599 = vweird.f32 %v2436
    %vm2600 = vweird.f32 %v2594
    %vm2601 = vmor %vm2599, %vm2600
    %v2602 = vsel %vm2601, %v2594, %v2598
    %v2603 = vand.u32 2147483647, %v2436
    %vm2604 = vcmp.eq.f32.partialorder %v2603, 8.507059e+37
    %v2605 = vand.u32 %v2436, 2147483648
    %v2606 = vor.u32 1.1754944e-38, %v2605
    %v2607 = vsel %vm2604, %v2606, %v2602
    %v2608 = vmul.f32 1.0, %v2607
    %v2609 = vrcp.pop %v2437
    %v2610 = vmul.f32 %v2437, %v2609
    %v2611 = vsub.f32 1.0, %v2610
    %v2612 = vmul.f32 %v2609, %v2611
    %v2613 = vadd.f32 %v2609, %v2612
    %vm2614 = vweird.f32 %v2437
    %vm2615 = vweird.f32 %v2609
    %vm2616 = vmor %vm2614, %vm2615
    %v2617 = vsel %vm2616, %v2609, %v2613
    %v2618 = vand.u32 2147483647, %v2437
    %vm2619 = vcmp.eq.f32.partialorder %v2618, 8.507059e+37
    %v2620 = vand.u32 %v2437, 2147483648
    %v2621 = vor.u32 1.1754944e-38, %v2620
    %v2622 = vsel %vm2619, %v2621, %v2617
    %v2623 = vmul.f32 1.0, %v2622
    %v2624 = vrcp.pop %v2438
    %v2625 = vmul.f32 %v2438, %v2624
    %v2626 = vsub.f32 1.0, %v2625
    %v2627 = vmul.f32 %v2624, %v2626
    %v2628 = vadd.f32 %v2624, %v2627
    %vm2629 = vweird.f32 %v2438
    %vm2630 = vweird.f32 %v2624
    %vm2631 = vmor %vm2629, %vm2630
    %v2632 = vsel %vm2631, %v2624, %v2628
    %v2633 = vand.u32 2147483647, %v2438
    %vm2634 = vcmp.eq.f32.partialorder %v2633, 8.507059e+37
    %v2635 = vand.u32 %v2438, 2147483648
    %v2636 = vor.u32 1.1754944e-38, %v2635
    %v2637 = vsel %vm2634, %v2636, %v2632
    %v2638 = vmul.f32 1.0, %v2637
    %v2639 = vrcp.pop %v2439
    %v2640 = vmul.f32 %v2439, %v2639
    %v2641 = vsub.f32 1.0, %v2640
    %v2642 = vmul.f32 %v2639, %v2641
    %v2643 = vadd.f32 %v2639, %v2642
    %vm2644 = vweird.f32 %v2439
    %vm2645 = vweird.f32 %v2639
    %vm2646 = vmor %vm2644, %vm2645
    %v2647 = vsel %vm2646, %v2639, %v2643
    %v2648 = vand.u32 2147483647, %v2439
    %vm2649 = vcmp.eq.f32.partialorder %v2648, 8.507059e+37
    %v2650 = vand.u32 %v2439, 2147483648
    %v2651 = vor.u32 1.1754944e-38, %v2650
    %v2652 = vsel %vm2649, %v2651, %v2647
    %v2653 = vmul.f32 1.0, %v2652
    %v2654 = vrcp.pop %v2440
    %v2655 = vmul.f32 %v2440, %v2654
    %v2656 = vsub.f32 1.0, %v2655
    %v2657 = vmul.f32 %v2654, %v2656
    %v2658 = vadd.f32 %v2654, %v2657
    %vm2659 = vweird.f32 %v2440
    %vm2660 = vweird.f32 %v2654
    %vm2661 = vmor %vm2659, %vm2660
    %v2662 = vsel %vm2661, %v2654, %v2658
    %v2663 = vand.u32 2147483647, %v2440
    %vm2664 = vcmp.eq.f32.partialorder %v2663, 8.507059e+37
    %v2665 = vand.u32 %v2440, 2147483648
    %v2666 = vor.u32 1.1754944e-38, %v2665
    %v2667 = vsel %vm2664, %v2666, %v2662
    %v2668 = vmul.f32 1.0, %v2667
    %v2669 = vrcp.pop %v2441
    %v2670 = vmul.f32 %v2441, %v2669
    %v2671 = vsub.f32 1.0, %v2670
    %v2672 = vmul.f32 %v2669, %v2671
    %v2673 = vadd.f32 %v2669, %v2672
    %vm2674 = vweird.f32 %v2441
    %vm2675 = vweird.f32 %v2669
    %vm2676 = vmor %vm2674, %vm2675
    %v2677 = vsel %vm2676, %v2669, %v2673
    %v2678 = vand.u32 2147483647, %v2441
    %vm2679 = vcmp.eq.f32.partialorder %v2678, 8.507059e+37
    %v2680 = vand.u32 %v2441, 2147483648
    %v2681 = vor.u32 1.1754944e-38, %v2680
    %v2682 = vsel %vm2679, %v2681, %v2677
    %v2683 = vmul.f32 1.0, %v2682
    %v2684 = vrcp.pop %v2442
    %v2685 = vmul.f32 %v2442, %v2684
    %v2686 = vsub.f32 1.0, %v2685
    %v2687 = vmul.f32 %v2684, %v2686
    %v2688 = vadd.f32 %v2684, %v2687
    %vm2689 = vweird.f32 %v2442
    %vm2690 = vweird.f32 %v2684
    %vm2691 = vmor %vm2689, %vm2690
    %v2692 = vsel %vm2691, %v2684, %v2688
    %v2693 = vand.u32 2147483647, %v2442
    %vm2694 = vcmp.eq.f32.partialorder %v2693, 8.507059e+37
    %v2695 = vand.u32 %v2442, 2147483648
    %v2696 = vor.u32 1.1754944e-38, %v2695
    %v2697 = vsel %vm2694, %v2696, %v2692
    %v2698 = vmul.f32 1.0, %v2697
    %v2699 = vrcp.pop %v2443
    %v2700 = vmul.f32 %v2443, %v2699
    %v2701 = vsub.f32 1.0, %v2700
    %v2702 = vmul.f32 %v2699, %v2701
    %v2703 = vadd.f32 %v2699, %v2702
    %vm2704 = vweird.f32 %v2443
    %vm2705 = vweird.f32 %v2699
    %vm2706 = vmor %vm2704, %vm2705
    %v2707 = vsel %vm2706, %v2699, %v2703
    %v2708 = vand.u32 2147483647, %v2443
    %vm2709 = vcmp.eq.f32.partialorder %v2708, 8.507059e+37
    %v2710 = vand.u32 %v2443, 2147483648
    %v2711 = vor.u32 1.1754944e-38, %v2710
    %v2712 = vsel %vm2709, %v2711, %v2707
    %v2713 = vmul.f32 1.0, %v2712
    %v2714 = vrcp.pop %v2444
    %v2715 = vmul.f32 %v2444, %v2714
    %v2716 = vsub.f32 1.0, %v2715
    %v2717 = vmul.f32 %v2714, %v2716
    %v2718 = vadd.f32 %v2714, %v2717
    %vm2719 = vweird.f32 %v2444
    %vm2720 = vweird.f32 %v2714
    %vm2721 = vmor %vm2719, %vm2720
    %v2722 = vsel %vm2721, %v2714, %v2718
    %v2723 = vand.u32 2147483647, %v2444
    %vm2724 = vcmp.eq.f32.partialorder %v2723, 8.507059e+37
    %v2725 = vand.u32 %v2444, 2147483648
    %v2726 = vor.u32 1.1754944e-38, %v2725
    %v2727 = vsel %vm2724, %v2726, %v2722
    %v2728 = vmul.f32 1.0, %v2727
    %v2729 = vrcp.pop %v2445
    %v2730 = vmul.f32 %v2445, %v2729
    %v2731 = vsub.f32 1.0, %v2730
    %v2732 = vmul.f32 %v2729, %v2731
    %v2733 = vadd.f32 %v2729, %v2732
    %vm2734 = vweird.f32 %v2445
    %vm2735 = vweird.f32 %v2729
    %vm2736 = vmor %vm2734, %vm2735
    %v2737 = vsel %vm2736, %v2729, %v2733
    %v2738 = vand.u32 2147483647, %v2445
    %vm2739 = vcmp.eq.f32.partialorder %v2738, 8.507059e+37
    %v2740 = vand.u32 %v2445, 2147483648
    %v2741 = vor.u32 1.1754944e-38, %v2740
    %v2742 = vsel %vm2739, %v2741, %v2737
    %v2743 = vmul.f32 1.0, %v2742
    %v2744 = vrcp.pop %v2446
    %v2745 = vmul.f32 %v2446, %v2744
    %v2746 = vsub.f32 1.0, %v2745
    %v2747 = vmul.f32 %v2744, %v2746
    %v2748 = vadd.f32 %v2744, %v2747
    %vm2749 = vweird.f32 %v2446
    %vm2750 = vweird.f32 %v2744
    %vm2751 = vmor %vm2749, %vm2750
    %v2752 = vsel %vm2751, %v2744, %v2748
    %v2753 = vand.u32 2147483647, %v2446
    %vm2754 = vcmp.eq.f32.partialorder %v2753, 8.507059e+37
    %v2755 = vand.u32 %v2446, 2147483648
    %v2756 = vor.u32 1.1754944e-38, %v2755
    %v2757 = vsel %vm2754, %v2756, %v2752
    %v2758 = vmul.f32 1.0, %v2757
    %v2759 = vrcp.pop %v2447
    %v2760 = vmul.f32 %v2447, %v2759
    %v2761 = vsub.f32 1.0, %v2760
    %v2762 = vmul.f32 %v2759, %v2761
    %v2763 = vadd.f32 %v2759, %v2762
    %vm2764 = vweird.f32 %v2447
    %vm2765 = vweird.f32 %v2759
    %vm2766 = vmor %vm2764, %vm2765
    %v2767 = vsel %vm2766, %v2759, %v2763
    %v2768 = vand.u32 2147483647, %v2447
    %vm2769 = vcmp.eq.f32.partialorder %v2768, 8.507059e+37
    %v2770 = vand.u32 %v2447, 2147483648
    %v2771 = vor.u32 1.1754944e-38, %v2770
    %v2772 = vsel %vm2769, %v2771, %v2767
    %v2773 = vmul.f32 1.0, %v2772
    %v2774 = vrcp.pop %v2448
    %v2775 = vmul.f32 %v2448, %v2774
    %v2776 = vsub.f32 1.0, %v2775
    %v2777 = vmul.f32 %v2774, %v2776
    %v2778 = vadd.f32 %v2774, %v2777
    %vm2779 = vweird.f32 %v2448
    %vm2780 = vweird.f32 %v2774
    %vm2781 = vmor %vm2779, %vm2780
    %v2782 = vsel %vm2781, %v2774, %v2778
    %v2783 = vand.u32 2147483647, %v2448
    %vm2784 = vcmp.eq.f32.partialorder %v2783, 8.507059e+37
    %v2785 = vand.u32 %v2448, 2147483648
    %v2786 = vor.u32 1.1754944e-38, %v2785
    %v2787 = vsel %vm2784, %v2786, %v2782
    %v2788 = vmul.f32 1.0, %v2787
    %v2789 = vrcp.pop %v2449
    %v2790 = vmul.f32 %v2449, %v2789
    %v2791 = vsub.f32 1.0, %v2790
    %v2792 = vmul.f32 %v2789, %v2791
    %v2793 = vadd.f32 %v2789, %v2792
    %vm2794 = vweird.f32 %v2449
    %vm2795 = vweird.f32 %v2789
    %vm2796 = vmor %vm2794, %vm2795
    %v2797 = vsel %vm2796, %v2789, %v2793
    %v2798 = vand.u32 2147483647, %v2449
    %vm2799 = vcmp.eq.f32.partialorder %v2798, 8.507059e+37
    %v2800 = vand.u32 %v2449, 2147483648
    %v2801 = vor.u32 1.1754944e-38, %v2800
    %v2802 = vsel %vm2799, %v2801, %v2797
    %v2803 = vmul.f32 1.0, %v2802
    %v2804 = vrcp.pop %v2450
    %v2805 = vmul.f32 %v2450, %v2804
    %v2806 = vsub.f32 1.0, %v2805
    %v2807 = vmul.f32 %v2804, %v2806
    %v2808 = vadd.f32 %v2804, %v2807
    %vm2809 = vweird.f32 %v2450
    %vm2810 = vweird.f32 %v2804
    %vm2811 = vmor %vm2809, %vm2810
    %v2812 = vsel %vm2811, %v2804, %v2808
    %v2813 = vand.u32 2147483647, %v2450
    %vm2814 = vcmp.eq.f32.partialorder %v2813, 8.507059e+37
    %v2815 = vand.u32 %v2450, 2147483648
    %v2816 = vor.u32 1.1754944e-38, %v2815
    %v2817 = vsel %vm2814, %v2816, %v2812
    %v2818 = vmul.f32 1.0, %v2817
    %v2819 = vrcp.pop %v2451
    %v2820 = vmul.f32 %v2451, %v2819
    %v2821 = vsub.f32 1.0, %v2820
    %v2822 = vmul.f32 %v2819, %v2821
    %v2823 = vadd.f32 %v2819, %v2822
    %vm2824 = vweird.f32 %v2451
    %vm2825 = vweird.f32 %v2819
    %vm2826 = vmor %vm2824, %vm2825
    %v2827 = vsel %vm2826, %v2819, %v2823
    %v2828 = vand.u32 2147483647, %v2451
    %vm2829 = vcmp.eq.f32.partialorder %v2828, 8.507059e+37
    %v2830 = vand.u32 %v2451, 2147483648
    %v2831 = vor.u32 1.1754944e-38, %v2830
    %v2832 = vsel %vm2829, %v2831, %v2827
    %v2833 = vmul.f32 1.0, %v2832
    %v2834 = vrcp.pop %v2452
    %v2835 = vmul.f32 %v2452, %v2834
    %v2836 = vsub.f32 1.0, %v2835
    %v2837 = vmul.f32 %v2834, %v2836
    %v2838 = vadd.f32 %v2834, %v2837
    %vm2839 = vweird.f32 %v2452
    %vm2840 = vweird.f32 %v2834
    %vm2841 = vmor %vm2839, %vm2840
    %v2842 = vsel %vm2841, %v2834, %v2838
    %v2843 = vand.u32 2147483647, %v2452
    %vm2844 = vcmp.eq.f32.partialorder %v2843, 8.507059e+37
    %v2845 = vand.u32 %v2452, 2147483648
    %v2846 = vor.u32 1.1754944e-38, %v2845
    %v2847 = vsel %vm2844, %v2846, %v2842
    %v2848 = vmul.f32 1.0, %v2847
    %v2849 = vrcp.pop %v2453
    %v2850 = vmul.f32 %v2453, %v2849
    %v2851 = vsub.f32 1.0, %v2850
    %v2852 = vmul.f32 %v2849, %v2851
    %v2853 = vadd.f32 %v2849, %v2852
    %vm2854 = vweird.f32 %v2453
    %vm2855 = vweird.f32 %v2849
    %vm2856 = vmor %vm2854, %vm2855
    %v2857 = vsel %vm2856, %v2849, %v2853
    %v2858 = vand.u32 2147483647, %v2453
    %vm2859 = vcmp.eq.f32.partialorder %v2858, 8.507059e+37
    %v2860 = vand.u32 %v2453, 2147483648
    %v2861 = vor.u32 1.1754944e-38, %v2860
    %v2862 = vsel %vm2859, %v2861, %v2857
    %v2863 = vmul.f32 1.0, %v2862
    %v2864 = vrcp.pop %v2454
    %v2865 = vmul.f32 %v2454, %v2864
    %v2866 = vsub.f32 1.0, %v2865
    %v2867 = vmul.f32 %v2864, %v2866
    %v2868 = vadd.f32 %v2864, %v2867
    %vm2869 = vweird.f32 %v2454
    %vm2870 = vweird.f32 %v2864
    %vm2871 = vmor %vm2869, %vm2870
    %v2872 = vsel %vm2871, %v2864, %v2868
    %v2873 = vand.u32 2147483647, %v2454
    %vm2874 = vcmp.eq.f32.partialorder %v2873, 8.507059e+37
    %v2875 = vand.u32 %v2454, 2147483648
    %v2876 = vor.u32 1.1754944e-38, %v2875
    %v2877 = vsel %vm2874, %v2876, %v2872
    %v2878 = vmul.f32 1.0, %v2877
    %v2879 = vrcp.pop %v2455
    %v2880 = vmul.f32 %v2455, %v2879
    %v2881 = vsub.f32 1.0, %v2880
    %v2882 = vmul.f32 %v2879, %v2881
    %v2883 = vadd.f32 %v2879, %v2882
    %vm2884 = vweird.f32 %v2455
    %vm2885 = vweird.f32 %v2879
    %vm2886 = vmor %vm2884, %vm2885
    %v2887 = vsel %vm2886, %v2879, %v2883
    %v2888 = vand.u32 2147483647, %v2455
    %vm2889 = vcmp.eq.f32.partialorder %v2888, 8.507059e+37
    %v2890 = vand.u32 %v2455, 2147483648
    %v2891 = vor.u32 1.1754944e-38, %v2890
    %v2892 = vsel %vm2889, %v2891, %v2887
    %v2893 = vmul.f32 1.0, %v2892
    %v2894 = vrcp.pop %v2456
    %v2895 = vmul.f32 %v2456, %v2894
    %v2896 = vsub.f32 1.0, %v2895
    %v2897 = vmul.f32 %v2894, %v2896
    %v2898 = vadd.f32 %v2894, %v2897
    %vm2899 = vweird.f32 %v2456
    %vm2900 = vweird.f32 %v2894
    %vm2901 = vmor %vm2899, %vm2900
    %v2902 = vsel %vm2901, %v2894, %v2898
    %v2903 = vand.u32 2147483647, %v2456
    %vm2904 = vcmp.eq.f32.partialorder %v2903, 8.507059e+37
    %v2905 = vand.u32 %v2456, 2147483648
    %v2906 = vor.u32 1.1754944e-38, %v2905
    %v2907 = vsel %vm2904, %v2906, %v2902
    %v2908 = vmul.f32 1.0, %v2907
    %v2909 = vrcp.pop %v2457
    %v2910 = vmul.f32 %v2457, %v2909
    %v2911 = vsub.f32 1.0, %v2910
    %v2912 = vmul.f32 %v2909, %v2911
    %v2913 = vadd.f32 %v2909, %v2912
    %vm2914 = vweird.f32 %v2457
    %vm2915 = vweird.f32 %v2909
    %vm2916 = vmor %vm2914, %vm2915
    %v2917 = vsel %vm2916, %v2909, %v2913
    %v2918 = vand.u32 2147483647, %v2457
    %vm2919 = vcmp.eq.f32.partialorder %v2918, 8.507059e+37
    %v2920 = vand.u32 %v2457, 2147483648
    %v2921 = vor.u32 1.1754944e-38, %v2920
    %v2922 = vsel %vm2919, %v2921, %v2917
    %v2923 = vmul.f32 1.0, %v2922
    %v2924 = vrcp.pop %v2458
    %v2925 = vmul.f32 %v2458, %v2924
    %v2926 = vsub.f32 1.0, %v2925
    %v2927 = vmul.f32 %v2924, %v2926
    %v2928 = vadd.f32 %v2924, %v2927
    %vm2929 = vweird.f32 %v2458
    %vm2930 = vweird.f32 %v2924
    %vm2931 = vmor %vm2929, %vm2930
    %v2932 = vsel %vm2931, %v2924, %v2928
    %v2933 = vand.u32 2147483647, %v2458
    %vm2934 = vcmp.eq.f32.partialorder %v2933, 8.507059e+37
    %v2935 = vand.u32 %v2458, 2147483648
    %v2936 = vor.u32 1.1754944e-38, %v2935
    %v2937 = vsel %vm2934, %v2936, %v2932
    %v2938 = vmul.f32 1.0, %v2937
    %v2939 = vsel %vm2330, 1, 0
    %vm2940 = vcmp.eq.s32.totalorder %v2939, 1
    %v2941 = vsel %vm2940, %v2473, %v2233
    %v2942 = vsel %vm2940, %v2488, %v2236
    %v2943 = vsel %vm2940, %v2503, %v2239
    %v2944 = vsel %vm2940, %v2518, %v2242
    %v2945 = vsel %vm2940, %v2533, %v2245
    %v2946 = vsel %vm2940, %v2548, %v2248
    %v2947 = vsel %vm2940, %v2563, %v2251
    %v2948 = vsel %vm2940, %v2578, %v2254
    %v2949 = vsel %vm2940, %v2593, %v2257
    %v2950 = vsel %vm2940, %v2608, %v2260
    %v2951 = vsel %vm2940, %v2623, %v2263
    %v2952 = vsel %vm2940, %v2638, %v2266
    %v2953 = vsel %vm2940, %v2653, %v2269
    %v2954 = vsel %vm2940, %v2668, %v2272
    %v2955 = vsel %vm2940, %v2683, %v2275
    %v2956 = vsel %vm2940, %v2698, %v2278
    %v2957 = vsel %vm2940, %v2713, %v2281
    %v2958 = vsel %vm2940, %v2728, %v2284
    %v2959 = vsel %vm2940, %v2743, %v2287
    %v2960 = vsel %vm2940, %v2758, %v2290
    %v2961 = vsel %vm2940, %v2773, %v2293
    %v2962 = vsel %vm2940, %v2788, %v2296
    %v2963 = vsel %vm2940, %v2803, %v2299
    %v2964 = vsel %vm2940, %v2818, %v2302
    %v2965 = vsel %vm2940, %v2833, %v2305
    %v2966 = vsel %vm2940, %v2848, %v2308
    %v2967 = vsel %vm2940, %v2863, %v2311
    %v2968 = vsel %vm2940, %v2878, %v2314
    %v2969 = vsel %vm2940, %v2893, %v2317
    %v2970 = vsel %vm2940, %v2908, %v2320
    %v2971 = vsel %vm2940, %v2923, %v2323
    %v2972 = vsel %vm2940, %v2938, %v2326
    %2973 = vxpose.xlu0.b32.start [1/16] %v2941, 128
    %2974 = vxpose.xlu0.b32.cont [2/16] %v2942, 128
    %2975 = vxpose.xlu0.b32.cont [3/16] %v2943, 128
    %2976 = vxpose.xlu0.b32.cont [4/16] %v2944, 128
    %2977 = vxpose.xlu0.b32.cont [5/16] %v2945, 128
    %2978 = vxpose.xlu0.b32.cont [6/16] %v2946, 128
    %2979 = vxpose.xlu0.b32.cont [7/16] %v2947, 128
    %2980 = vxpose.xlu0.b32.cont [8/16] %v2948, 128
    %2981 = vxpose.xlu0.b32.cont [9/16] %v2949, 128
    %2982 = vxpose.xlu0.b32.cont [10/16] %v2950, 128
    %2983 = vxpose.xlu0.b32.cont [11/16] %v2951, 128
    %2984 = vxpose.xlu0.b32.cont [12/16] %v2952, 128
    %2985 = vxpose.xlu0.b32.cont [13/16] %v2953, 128
    %2986 = vxpose.xlu0.b32.cont [14/16] %v2954, 128
    %2987 = vxpose.xlu0.b32.cont [15/16] %v2955, 128
    %2988 = vxpose.xlu0.b32.end [16/16] %v2956, 128
    %v2989 = vpop.trf.xlu0
    %v2990 = vpop.trf.xlu0
    %v2991 = vpop.trf.xlu0
    %v2992 = vpop.trf.xlu0
    %v2993 = vpop.trf.xlu0
    %v2994 = vpop.trf.xlu0
    %v2995 = vpop.trf.xlu0
    %v2996 = vpop.trf.xlu0
    %v2997 = vpop.trf.xlu0
    %v2998 = vpop.trf.xlu0
    %v2999 = vpop.trf.xlu0
    %v3000 = vpop.trf.xlu0
    %v3001 = vpop.trf.xlu0
    %v3002 = vpop.trf.xlu0
    %v3003 = vpop.trf.xlu0
    %v3004 = vpop.trf.xlu0
    %3005 = vxpose.xlu0.b32.start [1/16] %v2957, 128
    %3006 = vxpose.xlu0.b32.cont [2/16] %v2958, 128
    %3007 = vxpose.xlu0.b32.cont [3/16] %v2959, 128
    %3008 = vxpose.xlu0.b32.cont [4/16] %v2960, 128
    %3009 = vxpose.xlu0.b32.cont [5/16] %v2961, 128
    %3010 = vxpose.xlu0.b32.cont [6/16] %v2962, 128
    %3011 = vxpose.xlu0.b32.cont [7/16] %v2963, 128
    %3012 = vxpose.xlu0.b32.cont [8/16] %v2964, 128
    %3013 = vxpose.xlu0.b32.cont [9/16] %v2965, 128
    %3014 = vxpose.xlu0.b32.cont [10/16] %v2966, 128
    %3015 = vxpose.xlu0.b32.cont [11/16] %v2967, 128
    %3016 = vxpose.xlu0.b32.cont [12/16] %v2968, 128
    %3017 = vxpose.xlu0.b32.cont [13/16] %v2969, 128
    %3018 = vxpose.xlu0.b32.cont [14/16] %v2970, 128
    %3019 = vxpose.xlu0.b32.cont [15/16] %v2971, 128
    %3020 = vxpose.xlu0.b32.end [16/16] %v2972, 128
    %v3021 = vpop.trf.xlu0
    %v3022 = vpop.trf.xlu0
    %v3023 = vpop.trf.xlu0
    %v3024 = vpop.trf.xlu0
    %v3025 = vpop.trf.xlu0
    %v3026 = vpop.trf.xlu0
    %v3027 = vpop.trf.xlu0
    %v3028 = vpop.trf.xlu0
    %v3029 = vpop.trf.xlu0
    %v3030 = vpop.trf.xlu0
    %v3031 = vpop.trf.xlu0
    %v3032 = vpop.trf.xlu0
    %v3033 = vpop.trf.xlu0
    %v3034 = vpop.trf.xlu0
    %v3035 = vpop.trf.xlu0
    %v3036 = vpop.trf.xlu0
    %3037 = vst [vmem:[#allocation2] sm:$0xff] %v2989
    %3038 = vst [vmem:[#allocation2 + $0x8] sm:$0xff] %v3021
    %3039 = vst [vmem:[#allocation2 + $0x10] sm:$0xff] %v2990
    %3040 = vst [vmem:[#allocation2 + $0x18] sm:$0xff] %v3022
    %3041 = vst [vmem:[#allocation2 + $0x20] sm:$0xff] %v2991
    %3042 = vst [vmem:[#allocation2 + $0x28] sm:$0xff] %v3023
    // Predicated region
    $region46: #{tpu_custom_call.1} parent=1 // pred_check
      _
    $region47: #{tpu_custom_call.1} parent=1 // pred_check_branch
      %3044 = sbr.rel (0) target = $region49
    $region48: #{tpu_custom_call.1} parent=1 // pred_region
      %3046 = vsyncadd [#allocation3], 0
      %s3047 = sshll.u32 [#allocation2], 4
      %s3048 = int_to_ptr.vmem [resolvable:$true] %s3047
      %s3049 = sshll.u32 %s11, 4
      %s3050 = int_to_ptr.hbm [resolvable:$true] %s3049
      %3055 = dma.vmem_to_hbm [thread:$0]  %s3048, 768, %s3050, [#allocation3], 256, 256, 16
    $region49: #{tpu_custom_call.1} parent=1 // pred_fallthru
      _
    // Predicated region
    $region50: #{tpu_custom_call.1} parent=1 // pred_check
      _
    $region51: #{tpu_custom_call.1} parent=1 // pred_check_branch
      %3057 = sbr.rel (0) target = $region53
    $region52: #{tpu_custom_call.1} parent=1 // pred_region
      %3059 = dma.done [#allocation3], 768
    $region53: #{tpu_custom_call.1} parent=1 // pred_fallthru
      _
    %3060 = vsyncpa [#allocation3], 1

</llo_original>
